<compile_context>
chip_gen: v5e
topology: v5e:2x2
jax: 0.10.0
libtpu: 0.0.40
codegen_flags: <defaults>
</compile_context>

<pallas_src>
import numpy as np
import jax
import jax.numpy as jnp
from jax.experimental import pallas as pl
from jax.experimental.pallas import tpu as pltpu


def _boundary_masks(H, W, K):
    """(K*K, H*W) f32 mask: 1 where tap (dy, dx) reads inside the image."""
    p = K // 2
    rows = np.arange(H)[:, None]
    cols = np.arange(W)[None, :]
    m = np.zeros((K * K, H * W), np.float32)
    for dy in range(K):
        for dx in range(K):
            oy, ox = dy - p, dx - p
            ok = ((rows + oy >= 0) & (rows + oy < H) &
                  (cols + ox >= 0) & (cols + ox < W))
            m[dy * K + dx] = ok.astype(np.float32).reshape(-1)
    return m


def _tree_sum(xs):
    """Pairwise (balanced) sum of a list of arrays — exposes ILP to the VPU."""
    xs = [x for x in xs if x is not None]
    while len(xs) > 1:
        nxt = [xs[j] + xs[j + 1] for j in range(0, len(xs) - 1, 2)]
        if len(xs) % 2:
            nxt.append(xs[-1])
        xs = nxt
    return xs[0]


def make_focal_modulation(in_channels, out_channels, H, W, num_focal=3,
                          batch_block=None):
    C, Co, NF = in_channels, out_channels, num_focal
    HW = H * W
    ksizes = [2 * k + 3 for k in range(NF)]            # 3, 5, 7, ...
    masks_np = [_boundary_masks(H, W, K) for K in ksizes]
    NACC = 4                                           # partial accumulators

    def _sigmoid(x):
        return 1.0 / (1.0 + jnp.exp(-x))               # exp on EUP, f32

    def build_kernel(Bb):
        S = Bb * C                                     # stacked channel rows

        def kernel(*refs):
            x_ref, wall_ref, ball_ref = refs[:3]
            idx = 3
            wm_refs, db_refs = [], []
            for _ in range(NF):
                wm_refs.append(refs[idx])
                db_refs.append(refs[idx + 1])
                idx += 2
            wg_ref, bg_ref, wo_ref, bo_ref, o_ref = refs[idx:idx + 5]

            x = x_ref[...]                             # (S, HW), lane-dense

            # ---- proj_in: one fused block-diagonal matmul ----------------
            # Rows: [v (S) | k (S) | q_0..q_NF expanded to S rows each].
            # Every slice below starts at a multiple of S (=8) rows.
            y = jnp.dot(wall_ref[...], x,
                        preferred_element_type=jnp.float32) + ball_ref[...]
            v = y[0:S]
            k = y[S:2 * S]

            mods = []

            # ---- hierarchical depthwise focal levels (3x3, 5x5, 7x7) -----
            # Tap (dy, dx) = XLU roll of the flattened image; out-of-image
            # reads (including the vertical wrap through the flat HW axis)
            # are zeroed because the masked weights wm[t] were built from the
            # same (dy, dx) enumeration.
            for i in range(NF):
                K = ksizes[i]
                p = K // 2
                wm = wm_refs[i]                        # (K*K, S, HW) ref
                accs = [None] * NACC                   # round-robin partials
                for dy in range(K):
                    for dx in range(K):
                        t = dy * K + dx
                        s = (dy - p) * W + (dx - p)    # flat read offset
                        shifted = k if s == 0 else pltpu.roll(k, (-s) % HW,
                                                              axis=1)
                        term = shifted * wm[t]         # 1 mul + 1 add / tap
                        j = t % NACC
                        accs[j] = term if accs[j] is None else accs[j] + term
                acc = _tree_sum(accs) + db_refs[i][...]   # (S, 1) bias
                k = acc * _sigmoid(acc)                   # SiLU, f32
                mods.append(k * y[(2 + i) * S:(3 + i) * S])

            # ---- global context: AdaptiveAvgPool2d(1) -> 1x1 conv -> SiLU -
            gavg = jnp.sum(k, axis=1, keepdims=True) * (1.0 / float(HW))
            g = jnp.dot(wg_ref[...], gavg,
                        preferred_element_type=jnp.float32) + bg_ref[...]
            g = g * _sigmoid(g)                           # (S, 1)
            mods.append(g * y[(2 + NF) * S:(3 + NF) * S])

            # ---- modulation + out_proj (1x1 conv), lane-dense output -----
            mod = _tree_sum(mods)
            out = jnp.dot(wo_ref[...], v * mod,
                          preferred_element_type=jnp.float32) + bo_ref[...]
            o_ref[...] = out                              # (Bb*Co, HW)

        return kernel

    def fwd(x_nchw, params):
        B = x_nchw.shape[0]
        if batch_block is not None:
            Bb = batch_block
        else:
            Bb = 2 if B % 2 == 0 else 1   # fill the 8-row f32 sublane tile
        assert B % Bb == 0
        G = B // Bb
        S, So = Bb * C, Bb * Co
        kernel = build_kernel(Bb)

        f32 = jnp.float32
        eye = jnp.eye(Bb, dtype=f32)
        wpT = jnp.transpose(params['w_proj']).astype(f32)   # (Ctot, C)
        bp = params['b_proj'].astype(f32)

        # Block-diagonal fused proj_in weight; q rows replicated to C rows so
        # each output block is sublane-tile aligned and already channel-wise.
        blocks = [jnp.kron(eye, wpT[0:C]),                   # v
                  jnp.kron(eye, wpT[C:2 * C])]               # k
        biases = [jnp.tile(bp[0:C], Bb), jnp.tile(bp[C:2 * C], Bb)]
        for i in range(NF + 1):
            row = wpT[2 * C + i:2 * C + i + 1]               # (1, C)
            blocks.append(jnp.kron(eye, jnp.tile(row, (C, 1))))
            biases.append(jnp.full((S,), bp[2 * C + i], f32))
        w_all = jnp.concatenate(blocks, axis=0)              # ((3+NF)*S, S)
        b_all = jnp.concatenate(biases, axis=0)[:, None]     # ((3+NF)*S, 1)

        inputs = [x_nchw.astype(f32).reshape(G, S, HW), w_all, b_all]
        for i in range(NF):
            dw = params['dw'][i].astype(f32)                 # (K*K, C)
            w_tap = jnp.tile(dw, (1, Bb))                    # (K*K, S)
            wm = w_tap[:, :, None] * jnp.asarray(masks_np[i])[:, None, :]
            db = jnp.tile(params['db'][i].astype(f32), Bb)[:, None]
            inputs += [wm, db]                               # (K*K,S,HW),(S,1)
        inputs += [jnp.kron(eye, jnp.transpose(params['wg']).astype(f32)),
                   jnp.tile(params['bg'].astype(f32), Bb)[:, None],
                   jnp.kron(eye, jnp.transpose(params['wo']).astype(f32)),
                   jnp.tile(params['bo'].astype(f32), Bb)[:, None]]

        def full_spec(a):
            return pl.BlockSpec(a.shape, lambda b, _n=a.ndim: (0,) * _n)

        in_specs = [pl.BlockSpec((None, S, HW), lambda b: (b, 0, 0))]
        in_specs += [full_spec(a) for a in inputs[1:]]

        out_flat = pl.pallas_call(
            kernel,
            out_shape=jax.ShapeDtypeStruct((G, So, HW), jnp.float32),
            grid_spec=pltpu.PrefetchScalarGridSpec(
                num_scalar_prefetch=0,
                grid=(G,),
                in_specs=in_specs,
                out_specs=pl.BlockSpec((None, So, HW), lambda b: (b, 0, 0)),
            ),
            compiler_params=pltpu.CompilerParams(
                dimension_semantics=("parallel",),
                vmem_limit_bytes=32 * 1024 * 1024),
        )(*inputs)
        return out_flat.reshape(B, Co, H, W)

    return fwd


def ref_forward(x_nchw, params, num_focal=3):
    """Pure-JAX NCHW reference mirroring the PyTorch module."""
    C = params['w_proj'].shape[0]
    dn = ('NCHW', 'OIHW', 'NCHW')

    def conv1x1(x, w_io, b):
        w = jnp.transpose(w_io)[:, :, None, None]       # (Cout, Cin, 1, 1)
        y = jax.lax.conv_general_dilated(x, w, (1, 1), 'VALID',
                                         dimension_numbers=dn)
        return y + b[None, :, None, None]

    y = conv1x1(x_nchw, params['w_proj'], params['b_proj'])
    v = y[:, :C]
    k = y[:, C:2 * C]
    q = y[:, 2 * C:]
    o = []
    for i in range(num_focal):
        K = 2 * i + 3
        p = K // 2
        w = jnp.transpose(params['dw'][i]).reshape(C, 1, K, K)
        k = jax.lax.conv_general_dilated(k, w, (1, 1), [(p, p), (p, p)],
                                         dimension_numbers=dn,
                                         feature_group_count=C)
        k = k + params['db'][i][None, :, None, None]
        k = jax.nn.silu(k)
        o.append(k * q[:, i:i + 1])
    g = jnp.mean(k, axis=(2, 3), keepdims=True)
    g = conv1x1(g, params['wg'], params['bg'])
    g = jax.nn.silu(g)
    o.append(g * q[:, num_focal:num_focal + 1])
    mod = sum(o)
    return conv1x1(v * mod, params['wo'], params['bo'])


if __name__ == "__main__":
    B, Cin, Cout, H, W = 2, 4, 8, 16, 16
    NF = 3
    Ctot = 2 * Cin + NF + 1

    key = jax.random.PRNGKey(0)
    ks = jax.random.split(key, 3 + 2 * NF + 4)
    i = 0
    params = {}
    params['w_proj'] = 0.3 * jax.random.normal(ks[i], (Cin, Ctot), jnp.float32); i += 1
    params['b_proj'] = 0.1 * jax.random.normal(ks[i], (Ctot,), jnp.float32); i += 1
    params['dw'], params['db'] = [], []
    for f in range(NF):
        K = 2 * f + 3
        params['dw'].append(0.2 * jax.random.normal(ks[i], (K * K, Cin), jnp.float32)); i += 1
        params['db'].append(0.1 * jax.random.normal(ks[i], (Cin,), jnp.float32)); i += 1
    params['wg'] = 0.3 * jax.random.normal(ks[i], (Cin, Cin), jnp.float32); i += 1
    params['bg'] = 0.1 * jax.random.normal(ks[i], (Cin,), jnp.float32); i += 1
    params['wo'] = 0.3 * jax.random.normal(ks[i], (Cin, Cout), jnp.float32); i += 1
    params['bo'] = 0.1 * jax.random.normal(ks[i], (Cout,), jnp.float32); i += 1

    x_nchw = jax.random.normal(ks[i], (B, Cin, H, W), jnp.float32)

    fwd = make_focal_modulation(Cin, Cout, H, W, num_focal=NF)
    out = jax.block_until_ready(fwd(x_nchw, params))

    ref = ref_forward(x_nchw, params, num_focal=NF)

    assert out.shape == (B, Cout, H, W)
    assert jnp.allclose(out, ref, rtol=1e-4, atol=1e-4), (
        float(jnp.max(jnp.abs(out - ref))))
    print("KERNEL_OK")
</pallas_src>

<mosaic_0001>
module attributes {stable_mosaic.version = 11 : i64} {
  func.func @kernel(%arg0: i32, %arg1: memref<1x8x256xf32, #tpu.memory_space<vmem>>, %arg2: memref<48x8xf32, #tpu.memory_space<vmem>>, %arg3: memref<48x1xf32, #tpu.memory_space<vmem>>, %arg4: memref<9x8x256xf32, #tpu.memory_space<vmem>>, %arg5: memref<8x1xf32, #tpu.memory_space<vmem>>, %arg6: memref<25x8x256xf32, #tpu.memory_space<vmem>>, %arg7: memref<8x1xf32, #tpu.memory_space<vmem>>, %arg8: memref<49x8x256xf32, #tpu.memory_space<vmem>>, %arg9: memref<8x1xf32, #tpu.memory_space<vmem>>, %arg10: memref<8x8xf32, #tpu.memory_space<vmem>>, %arg11: memref<8x1xf32, #tpu.memory_space<vmem>>, %arg12: memref<16x8xf32, #tpu.memory_space<vmem>>, %arg13: memref<16x1xf32, #tpu.memory_space<vmem>>, %arg14: memref<1x16x256xf32, #tpu.memory_space<vmem>>) attributes {dimension_semantics = [#tpu.dimension_semantics<parallel>], iteration_bounds = array<i64: 1>, scalar_prefetch = 0 : i64, scratch_operands = 0 : i64, tpu.core_type = #tpu.core_type<tc>, window_params = [{transform_indices = @transform_0, window_bounds = array<i64: 1, 8, 256>}, {pipeline_mode = #tpu.pipeline_mode<synchronous>, transform_indices = @transform_1, window_bounds = array<i64: 48, 8>}, {pipeline_mode = #tpu.pipeline_mode<synchronous>, transform_indices = @transform_2, window_bounds = array<i64: 48, 1>}, {pipeline_mode = #tpu.pipeline_mode<synchronous>, transform_indices = @transform_3, window_bounds = array<i64: 9, 8, 256>}, {pipeline_mode = #tpu.pipeline_mode<synchronous>, transform_indices = @transform_4, window_bounds = array<i64: 8, 1>}, {pipeline_mode = #tpu.pipeline_mode<synchronous>, transform_indices = @transform_5, window_bounds = array<i64: 25, 8, 256>}, {pipeline_mode = #tpu.pipeline_mode<synchronous>, transform_indices = @transform_6, window_bounds = array<i64: 8, 1>}, {pipeline_mode = #tpu.pipeline_mode<synchronous>, transform_indices = @transform_7, window_bounds = array<i64: 49, 8, 256>}, {pipeline_mode = #tpu.pipeline_mode<synchronous>, transform_indices = @transform_8, window_bounds = array<i64: 8, 1>}, {pipeline_mode = #tpu.pipeline_mode<synchronous>, transform_indices = @transform_9, window_bounds = array<i64: 8, 8>}, {pipeline_mode = #tpu.pipeline_mode<synchronous>, transform_indices = @transform_10, window_bounds = array<i64: 8, 1>}, {pipeline_mode = #tpu.pipeline_mode<synchronous>, transform_indices = @transform_11, window_bounds = array<i64: 16, 8>}, {pipeline_mode = #tpu.pipeline_mode<synchronous>, transform_indices = @transform_12, window_bounds = array<i64: 16, 1>}, {transform_indices = @transform_13, window_bounds = array<i64: 1, 16, 256>}]} {
    %c0 = arith.constant 0 : index
    %c0_0 = arith.constant 0 : index
    %c0_1 = arith.constant 0 : index
    %0 = vector.load %arg1[%c0, %c0_0, %c0_1] : memref<1x8x256xf32, #tpu.memory_space<vmem>>, vector<1x8x256xf32>
    %1 = vector.shape_cast %0 : vector<1x8x256xf32> to vector<8x256xf32>
    %c0_2 = arith.constant 0 : index
    %c0_3 = arith.constant 0 : index
    %2 = vector.load %arg2[%c0_2, %c0_3] : memref<48x8xf32, #tpu.memory_space<vmem>>, vector<48x8xf32>
    %cst = arith.constant dense<0.000000e+00> : vector<48x256xf32>
    %3 = tpu.matmul %2, %1, %cst {dimension_numbers = #tpu.dot_dimension_numbers<[1], [0], [0], [1], [0, 0, 1, 1], [], []>} : vector<48x8xf32>, vector<8x256xf32>, vector<48x256xf32> -> vector<48x256xf32>
    %c0_4 = arith.constant 0 : index
    %c0_5 = arith.constant 0 : index
    %4 = vector.load %arg3[%c0_4, %c0_5] : memref<48x1xf32, #tpu.memory_space<vmem>>, vector<48x1xf32>
    %5 = vector.broadcast %4 : vector<48x1xf32> to vector<48x256xf32>
    %6 = arith.addf %3, %5 : vector<48x256xf32>
    %7 = vector.extract_strided_slice %6 {offsets = [0, 0], sizes = [8, 256], strides = [1, 1]} : vector<48x256xf32> to vector<8x256xf32>
    %8 = vector.extract_strided_slice %6 {offsets = [8, 0], sizes = [8, 256], strides = [1, 1]} : vector<48x256xf32> to vector<8x256xf32>
    %c17_i32 = arith.constant 17 : i32
    %9 = tpu.dynamic_rotate %8 by %c17_i32 dim 1 : vector<8x256xf32>, i32 -> vector<8x256xf32>
    %c0_6 = arith.constant 0 : index
    %c0_7 = arith.constant 0 : index
    %c0_8 = arith.constant 0 : index
    %10 = vector.load %arg4[%c0_6, %c0_7, %c0_8] : memref<9x8x256xf32, #tpu.memory_space<vmem>>, vector<1x8x256xf32>
    %11 = vector.shape_cast %10 : vector<1x8x256xf32> to vector<8x256xf32>
    %12 = arith.mulf %9, %11 : vector<8x256xf32>
    %c16_i32 = arith.constant 16 : i32
    %13 = tpu.dynamic_rotate %8 by %c16_i32 dim 1 : vector<8x256xf32>, i32 -> vector<8x256xf32>
    %c1 = arith.constant 1 : index
    %c0_9 = arith.constant 0 : index
    %c0_10 = arith.constant 0 : index
    %14 = vector.load %arg4[%c1, %c0_9, %c0_10] : memref<9x8x256xf32, #tpu.memory_space<vmem>>, vector<1x8x256xf32>
    %15 = vector.shape_cast %14 : vector<1x8x256xf32> to vector<8x256xf32>
    %16 = arith.mulf %13, %15 : vector<8x256xf32>
    %c15_i32 = arith.constant 15 : i32
    %17 = tpu.dynamic_rotate %8 by %c15_i32 dim 1 : vector<8x256xf32>, i32 -> vector<8x256xf32>
    %c2 = arith.constant 2 : index
    %c0_11 = arith.constant 0 : index
    %c0_12 = arith.constant 0 : index
    %18 = vector.load %arg4[%c2, %c0_11, %c0_12] : memref<9x8x256xf32, #tpu.memory_space<vmem>>, vector<1x8x256xf32>
    %19 = vector.shape_cast %18 : vector<1x8x256xf32> to vector<8x256xf32>
    %20 = arith.mulf %17, %19 : vector<8x256xf32>
    %c1_i32 = arith.constant 1 : i32
    %21 = tpu.dynamic_rotate %8 by %c1_i32 dim 1 : vector<8x256xf32>, i32 -> vector<8x256xf32>
    %c3 = arith.constant 3 : index
    %c0_13 = arith.constant 0 : index
    %c0_14 = arith.constant 0 : index
    %22 = vector.load %arg4[%c3, %c0_13, %c0_14] : memref<9x8x256xf32, #tpu.memory_space<vmem>>, vector<1x8x256xf32>
    %23 = vector.shape_cast %22 : vector<1x8x256xf32> to vector<8x256xf32>
    %24 = arith.mulf %21, %23 : vector<8x256xf32>
    %c4 = arith.constant 4 : index
    %c0_15 = arith.constant 0 : index
    %c0_16 = arith.constant 0 : index
    %25 = vector.load %arg4[%c4, %c0_15, %c0_16] : memref<9x8x256xf32, #tpu.memory_space<vmem>>, vector<1x8x256xf32>
    %26 = vector.shape_cast %25 : vector<1x8x256xf32> to vector<8x256xf32>
    %27 = arith.mulf %8, %26 : vector<8x256xf32>
    %28 = arith.addf %12, %27 : vector<8x256xf32>
    %c255_i32 = arith.constant 255 : i32
    %29 = tpu.dynamic_rotate %8 by %c255_i32 dim 1 : vector<8x256xf32>, i32 -> vector<8x256xf32>
    %c5 = arith.constant 5 : index
    %c0_17 = arith.constant 0 : index
    %c0_18 = arith.constant 0 : index
    %30 = vector.load %arg4[%c5, %c0_17, %c0_18] : memref<9x8x256xf32, #tpu.memory_space<vmem>>, vector<1x8x256xf32>
    %31 = vector.shape_cast %30 : vector<1x8x256xf32> to vector<8x256xf32>
    %32 = arith.mulf %29, %31 : vector<8x256xf32>
    %33 = arith.addf %16, %32 : vector<8x256xf32>
    %c241_i32 = arith.constant 241 : i32
    %34 = tpu.dynamic_rotate %8 by %c241_i32 dim 1 : vector<8x256xf32>, i32 -> vector<8x256xf32>
    %c6 = arith.constant 6 : index
    %c0_19 = arith.constant 0 : index
    %c0_20 = arith.constant 0 : index
    %35 = vector.load %arg4[%c6, %c0_19, %c0_20] : memref<9x8x256xf32, #tpu.memory_space<vmem>>, vector<1x8x256xf32>
    %36 = vector.shape_cast %35 : vector<1x8x256xf32> to vector<8x256xf32>
    %37 = arith.mulf %34, %36 : vector<8x256xf32>
    %38 = arith.addf %20, %37 : vector<8x256xf32>
    %c240_i32 = arith.constant 240 : i32
    %39 = tpu.dynamic_rotate %8 by %c240_i32 dim 1 : vector<8x256xf32>, i32 -> vector<8x256xf32>
    %c7 = arith.constant 7 : index
    %c0_21 = arith.constant 0 : index
    %c0_22 = arith.constant 0 : index
    %40 = vector.load %arg4[%c7, %c0_21, %c0_22] : memref<9x8x256xf32, #tpu.memory_space<vmem>>, vector<1x8x256xf32>
    %41 = vector.shape_cast %40 : vector<1x8x256xf32> to vector<8x256xf32>
    %42 = arith.mulf %39, %41 : vector<8x256xf32>
    %43 = arith.addf %24, %42 : vector<8x256xf32>
    %c239_i32 = arith.constant 239 : i32
    %44 = tpu.dynamic_rotate %8 by %c239_i32 dim 1 : vector<8x256xf32>, i32 -> vector<8x256xf32>
    %c8 = arith.constant 8 : index
    %c0_23 = arith.constant 0 : index
    %c0_24 = arith.constant 0 : index
    %45 = vector.load %arg4[%c8, %c0_23, %c0_24] : memref<9x8x256xf32, #tpu.memory_space<vmem>>, vector<1x8x256xf32>
    %46 = vector.shape_cast %45 : vector<1x8x256xf32> to vector<8x256xf32>
    %47 = arith.mulf %44, %46 : vector<8x256xf32>
    %48 = arith.addf %28, %47 : vector<8x256xf32>
    %49 = arith.addf %48, %33 : vector<8x256xf32>
    %50 = arith.addf %38, %43 : vector<8x256xf32>
    %51 = arith.addf %49, %50 : vector<8x256xf32>
    %c0_25 = arith.constant 0 : index
    %c0_26 = arith.constant 0 : index
    %52 = vector.load %arg5[%c0_25, %c0_26] : memref<8x1xf32, #tpu.memory_space<vmem>>, vector<8x1xf32>
    %53 = vector.broadcast %52 : vector<8x1xf32> to vector<8x256xf32>
    %54 = arith.addf %51, %53 : vector<8x256xf32>
    %cst_27 = arith.constant 0.000000e+00 : f32
    %55 = vector.broadcast %cst_27 : f32 to vector<8x256xf32>
    %56 = arith.subf %55, %54 : vector<8x256xf32>
    %57 = math.exp %56 : vector<8x256xf32>
    %cst_28 = arith.constant 1.000000e+00 : f32
    %58 = vector.broadcast %cst_28 : f32 to vector<8x256xf32>
    %59 = arith.addf %58, %57 : vector<8x256xf32>
    %cst_29 = arith.constant 1.000000e+00 : f32
    %60 = vector.broadcast %cst_29 : f32 to vector<8x256xf32>
    %61 = arith.divf %60, %59 : vector<8x256xf32>
    %62 = arith.mulf %54, %61 : vector<8x256xf32>
    %63 = vector.extract_strided_slice %6 {offsets = [16, 0], sizes = [8, 256], strides = [1, 1]} : vector<48x256xf32> to vector<8x256xf32>
    %64 = arith.mulf %62, %63 : vector<8x256xf32>
    %c34_i32 = arith.constant 34 : i32
    %65 = tpu.dynamic_rotate %62 by %c34_i32 dim 1 : vector<8x256xf32>, i32 -> vector<8x256xf32>
    %c0_30 = arith.constant 0 : index
    %c0_31 = arith.constant 0 : index
    %c0_32 = arith.constant 0 : index
    %66 = vector.load %arg6[%c0_30, %c0_31, %c0_32] : memref<25x8x256xf32, #tpu.memory_space<vmem>>, vector<1x8x256xf32>
    %67 = vector.shape_cast %66 : vector<1x8x256xf32> to vector<8x256xf32>
    %68 = arith.mulf %65, %67 : vector<8x256xf32>
    %c33_i32 = arith.constant 33 : i32
    %69 = tpu.dynamic_rotate %62 by %c33_i32 dim 1 : vector<8x256xf32>, i32 -> vector<8x256xf32>
    %c1_33 = arith.constant 1 : index
    %c0_34 = arith.constant 0 : index
    %c0_35 = arith.constant 0 : index
    %70 = vector.load %arg6[%c1_33, %c0_34, %c0_35] : memref<25x8x256xf32, #tpu.memory_space<vmem>>, vector<1x8x256xf32>
    %71 = vector.shape_cast %70 : vector<1x8x256xf32> to vector<8x256xf32>
    %72 = arith.mulf %69, %71 : vector<8x256xf32>
    %c32_i32 = arith.constant 32 : i32
    %73 = tpu.dynamic_rotate %62 by %c32_i32 dim 1 : vector<8x256xf32>, i32 -> vector<8x256xf32>
    %c2_36 = arith.constant 2 : index
    %c0_37 = arith.constant 0 : index
    %c0_38 = arith.constant 0 : index
    %74 = vector.load %arg6[%c2_36, %c0_37, %c0_38] : memref<25x8x256xf32, #tpu.memory_space<vmem>>, vector<1x8x256xf32>
    %75 = vector.shape_cast %74 : vector<1x8x256xf32> to vector<8x256xf32>
    %76 = arith.mulf %73, %75 : vector<8x256xf32>
    %c31_i32 = arith.constant 31 : i32
    %77 = tpu.dynamic_rotate %62 by %c31_i32 dim 1 : vector<8x256xf32>, i32 -> vector<8x256xf32>
    %c3_39 = arith.constant 3 : index
    %c0_40 = arith.constant 0 : index
    %c0_41 = arith.constant 0 : index
    %78 = vector.load %arg6[%c3_39, %c0_40, %c0_41] : memref<25x8x256xf32, #tpu.memory_space<vmem>>, vector<1x8x256xf32>
    %79 = vector.shape_cast %78 : vector<1x8x256xf32> to vector<8x256xf32>
    %80 = arith.mulf %77, %79 : vector<8x256xf32>
    %c30_i32 = arith.constant 30 : i32
    %81 = tpu.dynamic_rotate %62 by %c30_i32 dim 1 : vector<8x256xf32>, i32 -> vector<8x256xf32>
    %c4_42 = arith.constant 4 : index
    %c0_43 = arith.constant 0 : index
    %c0_44 = arith.constant 0 : index
    %82 = vector.load %arg6[%c4_42, %c0_43, %c0_44] : memref<25x8x256xf32, #tpu.memory_space<vmem>>, vector<1x8x256xf32>
    %83 = vector.shape_cast %82 : vector<1x8x256xf32> to vector<8x256xf32>
    %84 = arith.mulf %81, %83 : vector<8x256xf32>
    %85 = arith.addf %68, %84 : vector<8x256xf32>
    %c18_i32 = arith.constant 18 : i32
    %86 = tpu.dynamic_rotate %62 by %c18_i32 dim 1 : vector<8x256xf32>, i32 -> vector<8x256xf32>
    %c5_45 = arith.constant 5 : index
    %c0_46 = arith.constant 0 : index
    %c0_47 = arith.constant 0 : index
    %87 = vector.load %arg6[%c5_45, %c0_46, %c0_47] : memref<25x8x256xf32, #tpu.memory_space<vmem>>, vector<1x8x256xf32>
    %88 = vector.shape_cast %87 : vector<1x8x256xf32> to vector<8x256xf32>
    %89 = arith.mulf %86, %88 : vector<8x256xf32>
    %90 = arith.addf %72, %89 : vector<8x256xf32>
    %c17_i32_48 = arith.constant 17 : i32
    %91 = tpu.dynamic_rotate %62 by %c17_i32_48 dim 1 : vector<8x256xf32>, i32 -> vector<8x256xf32>
    %c6_49 = arith.constant 6 : index
    %c0_50 = arith.constant 0 : index
    %c0_51 = arith.constant 0 : index
    %92 = vector.load %arg6[%c6_49, %c0_50, %c0_51] : memref<25x8x256xf32, #tpu.memory_space<vmem>>, vector<1x8x256xf32>
    %93 = vector.shape_cast %92 : vector<1x8x256xf32> to vector<8x256xf32>
    %94 = arith.mulf %91, %93 : vector<8x256xf32>
    %95 = arith.addf %76, %94 : vector<8x256xf32>
    %c16_i32_52 = arith.constant 16 : i32
    %96 = tpu.dynamic_rotate %62 by %c16_i32_52 dim 1 : vector<8x256xf32>, i32 -> vector<8x256xf32>
    %c7_53 = arith.constant 7 : index
    %c0_54 = arith.constant 0 : index
    %c0_55 = arith.constant 0 : index
    %97 = vector.load %arg6[%c7_53, %c0_54, %c0_55] : memref<25x8x256xf32, #tpu.memory_space<vmem>>, vector<1x8x256xf32>
    %98 = vector.shape_cast %97 : vector<1x8x256xf32> to vector<8x256xf32>
    %99 = arith.mulf %96, %98 : vector<8x256xf32>
    %100 = arith.addf %80, %99 : vector<8x256xf32>
    %c15_i32_56 = arith.constant 15 : i32
    %101 = tpu.dynamic_rotate %62 by %c15_i32_56 dim 1 : vector<8x256xf32>, i32 -> vector<8x256xf32>
    %c8_57 = arith.constant 8 : index
    %c0_58 = arith.constant 0 : index
    %c0_59 = arith.constant 0 : index
    %102 = vector.load %arg6[%c8_57, %c0_58, %c0_59] : memref<25x8x256xf32, #tpu.memory_space<vmem>>, vector<1x8x256xf32>
    %103 = vector.shape_cast %102 : vector<1x8x256xf32> to vector<8x256xf32>
    %104 = arith.mulf %101, %103 : vector<8x256xf32>
    %105 = arith.addf %85, %104 : vector<8x256xf32>
    %c14_i32 = arith.constant 14 : i32
    %106 = tpu.dynamic_rotate %62 by %c14_i32 dim 1 : vector<8x256xf32>, i32 -> vector<8x256xf32>
    %c9 = arith.constant 9 : index
    %c0_60 = arith.constant 0 : index
    %c0_61 = arith.constant 0 : index
    %107 = vector.load %arg6[%c9, %c0_60, %c0_61] : memref<25x8x256xf32, #tpu.memory_space<vmem>>, vector<1x8x256xf32>
    %108 = vector.shape_cast %107 : vector<1x8x256xf32> to vector<8x256xf32>
    %109 = arith.mulf %106, %108 : vector<8x256xf32>
    %110 = arith.addf %90, %109 : vector<8x256xf32>
    %c2_i32 = arith.constant 2 : i32
    %111 = tpu.dynamic_rotate %62 by %c2_i32 dim 1 : vector<8x256xf32>, i32 -> vector<8x256xf32>
    %c10 = arith.constant 10 : index
    %c0_62 = arith.constant 0 : index
    %c0_63 = arith.constant 0 : index
    %112 = vector.load %arg6[%c10, %c0_62, %c0_63] : memref<25x8x256xf32, #tpu.memory_space<vmem>>, vector<1x8x256xf32>
    %113 = vector.shape_cast %112 : vector<1x8x256xf32> to vector<8x256xf32>
    %114 = arith.mulf %111, %113 : vector<8x256xf32>
    %115 = arith.addf %95, %114 : vector<8x256xf32>
    %c1_i32_64 = arith.constant 1 : i32
    %116 = tpu.dynamic_rotate %62 by %c1_i32_64 dim 1 : vector<8x256xf32>, i32 -> vector<8x256xf32>
    %c11 = arith.constant 11 : index
    %c0_65 = arith.constant 0 : index
    %c0_66 = arith.constant 0 : index
    %117 = vector.load %arg6[%c11, %c0_65, %c0_66] : memref<25x8x256xf32, #tpu.memory_space<vmem>>, vector<1x8x256xf32>
    %118 = vector.shape_cast %117 : vector<1x8x256xf32> to vector<8x256xf32>
    %119 = arith.mulf %116, %118 : vector<8x256xf32>
    %120 = arith.addf %100, %119 : vector<8x256xf32>
    %c12 = arith.constant 12 : index
    %c0_67 = arith.constant 0 : index
    %c0_68 = arith.constant 0 : index
    %121 = vector.load %arg6[%c12, %c0_67, %c0_68] : memref<25x8x256xf32, #tpu.memory_space<vmem>>, vector<1x8x256xf32>
    %122 = vector.shape_cast %121 : vector<1x8x256xf32> to vector<8x256xf32>
    %123 = arith.mulf %62, %122 : vector<8x256xf32>
    %124 = arith.addf %105, %123 : vector<8x256xf32>
    %c255_i32_69 = arith.constant 255 : i32
    %125 = tpu.dynamic_rotate %62 by %c255_i32_69 dim 1 : vector<8x256xf32>, i32 -> vector<8x256xf32>
    %c13 = arith.constant 13 : index
    %c0_70 = arith.constant 0 : index
    %c0_71 = arith.constant 0 : index
    %126 = vector.load %arg6[%c13, %c0_70, %c0_71] : memref<25x8x256xf32, #tpu.memory_space<vmem>>, vector<1x8x256xf32>
    %127 = vector.shape_cast %126 : vector<1x8x256xf32> to vector<8x256xf32>
    %128 = arith.mulf %125, %127 : vector<8x256xf32>
    %129 = arith.addf %110, %128 : vector<8x256xf32>
    %c254_i32 = arith.constant 254 : i32
    %130 = tpu.dynamic_rotate %62 by %c254_i32 dim 1 : vector<8x256xf32>, i32 -> vector<8x256xf32>
    %c14 = arith.constant 14 : index
    %c0_72 = arith.constant 0 : index
    %c0_73 = arith.constant 0 : index
    %131 = vector.load %arg6[%c14, %c0_72, %c0_73] : memref<25x8x256xf32, #tpu.memory_space<vmem>>, vector<1x8x256xf32>
    %132 = vector.shape_cast %131 : vector<1x8x256xf32> to vector<8x256xf32>
    %133 = arith.mulf %130, %132 : vector<8x256xf32>
    %134 = arith.addf %115, %133 : vector<8x256xf32>
    %c242_i32 = arith.constant 242 : i32
    %135 = tpu.dynamic_rotate %62 by %c242_i32 dim 1 : vector<8x256xf32>, i32 -> vector<8x256xf32>
    %c15 = arith.constant 15 : index
    %c0_74 = arith.constant 0 : index
    %c0_75 = arith.constant 0 : index
    %136 = vector.load %arg6[%c15, %c0_74, %c0_75] : memref<25x8x256xf32, #tpu.memory_space<vmem>>, vector<1x8x256xf32>
    %137 = vector.shape_cast %136 : vector<1x8x256xf32> to vector<8x256xf32>
    %138 = arith.mulf %135, %137 : vector<8x256xf32>
    %139 = arith.addf %120, %138 : vector<8x256xf32>
    %c241_i32_76 = arith.constant 241 : i32
    %140 = tpu.dynamic_rotate %62 by %c241_i32_76 dim 1 : vector<8x256xf32>, i32 -> vector<8x256xf32>
    %c16 = arith.constant 16 : index
    %c0_77 = arith.constant 0 : index
    %c0_78 = arith.constant 0 : index
    %141 = vector.load %arg6[%c16, %c0_77, %c0_78] : memref<25x8x256xf32, #tpu.memory_space<vmem>>, vector<1x8x256xf32>
    %142 = vector.shape_cast %141 : vector<1x8x256xf32> to vector<8x256xf32>
    %143 = arith.mulf %140, %142 : vector<8x256xf32>
    %144 = arith.addf %124, %143 : vector<8x256xf32>
    %c240_i32_79 = arith.constant 240 : i32
    %145 = tpu.dynamic_rotate %62 by %c240_i32_79 dim 1 : vector<8x256xf32>, i32 -> vector<8x256xf32>
    %c17 = arith.constant 17 : index
    %c0_80 = arith.constant 0 : index
    %c0_81 = arith.constant 0 : index
    %146 = vector.load %arg6[%c17, %c0_80, %c0_81] : memref<25x8x256xf32, #tpu.memory_space<vmem>>, vector<1x8x256xf32>
    %147 = vector.shape_cast %146 : vector<1x8x256xf32> to vector<8x256xf32>
    %148 = arith.mulf %145, %147 : vector<8x256xf32>
    %149 = arith.addf %129, %148 : vector<8x256xf32>
    %c239_i32_82 = arith.constant 239 : i32
    %150 = tpu.dynamic_rotate %62 by %c239_i32_82 dim 1 : vector<8x256xf32>, i32 -> vector<8x256xf32>
    %c18 = arith.constant 18 : index
    %c0_83 = arith.constant 0 : index
    %c0_84 = arith.constant 0 : index
    %151 = vector.load %arg6[%c18, %c0_83, %c0_84] : memref<25x8x256xf32, #tpu.memory_space<vmem>>, vector<1x8x256xf32>
    %152 = vector.shape_cast %151 : vector<1x8x256xf32> to vector<8x256xf32>
    %153 = arith.mulf %150, %152 : vector<8x256xf32>
    %154 = arith.addf %134, %153 : vector<8x256xf32>
    %c238_i32 = arith.constant 238 : i32
    %155 = tpu.dynamic_rotate %62 by %c238_i32 dim 1 : vector<8x256xf32>, i32 -> vector<8x256xf32>
    %c19 = arith.constant 19 : index
    %c0_85 = arith.constant 0 : index
    %c0_86 = arith.constant 0 : index
    %156 = vector.load %arg6[%c19, %c0_85, %c0_86] : memref<25x8x256xf32, #tpu.memory_space<vmem>>, vector<1x8x256xf32>
    %157 = vector.shape_cast %156 : vector<1x8x256xf32> to vector<8x256xf32>
    %158 = arith.mulf %155, %157 : vector<8x256xf32>
    %159 = arith.addf %139, %158 : vector<8x256xf32>
    %c226_i32 = arith.constant 226 : i32
    %160 = tpu.dynamic_rotate %62 by %c226_i32 dim 1 : vector<8x256xf32>, i32 -> vector<8x256xf32>
    %c20 = arith.constant 20 : index
    %c0_87 = arith.constant 0 : index
    %c0_88 = arith.constant 0 : index
    %161 = vector.load %arg6[%c20, %c0_87, %c0_88] : memref<25x8x256xf32, #tpu.memory_space<vmem>>, vector<1x8x256xf32>
    %162 = vector.shape_cast %161 : vector<1x8x256xf32> to vector<8x256xf32>
    %163 = arith.mulf %160, %162 : vector<8x256xf32>
    %164 = arith.addf %144, %163 : vector<8x256xf32>
    %c225_i32 = arith.constant 225 : i32
    %165 = tpu.dynamic_rotate %62 by %c225_i32 dim 1 : vector<8x256xf32>, i32 -> vector<8x256xf32>
    %c21 = arith.constant 21 : index
    %c0_89 = arith.constant 0 : index
    %c0_90 = arith.constant 0 : index
    %166 = vector.load %arg6[%c21, %c0_89, %c0_90] : memref<25x8x256xf32, #tpu.memory_space<vmem>>, vector<1x8x256xf32>
    %167 = vector.shape_cast %166 : vector<1x8x256xf32> to vector<8x256xf32>
    %168 = arith.mulf %165, %167 : vector<8x256xf32>
    %169 = arith.addf %149, %168 : vector<8x256xf32>
    %c224_i32 = arith.constant 224 : i32
    %170 = tpu.dynamic_rotate %62 by %c224_i32 dim 1 : vector<8x256xf32>, i32 -> vector<8x256xf32>
    %c22 = arith.constant 22 : index
    %c0_91 = arith.constant 0 : index
    %c0_92 = arith.constant 0 : index
    %171 = vector.load %arg6[%c22, %c0_91, %c0_92] : memref<25x8x256xf32, #tpu.memory_space<vmem>>, vector<1x8x256xf32>
    %172 = vector.shape_cast %171 : vector<1x8x256xf32> to vector<8x256xf32>
    %173 = arith.mulf %170, %172 : vector<8x256xf32>
    %174 = arith.addf %154, %173 : vector<8x256xf32>
    %c223_i32 = arith.constant 223 : i32
    %175 = tpu.dynamic_rotate %62 by %c223_i32 dim 1 : vector<8x256xf32>, i32 -> vector<8x256xf32>
    %c23 = arith.constant 23 : index
    %c0_93 = arith.constant 0 : index
    %c0_94 = arith.constant 0 : index
    %176 = vector.load %arg6[%c23, %c0_93, %c0_94] : memref<25x8x256xf32, #tpu.memory_space<vmem>>, vector<1x8x256xf32>
    %177 = vector.shape_cast %176 : vector<1x8x256xf32> to vector<8x256xf32>
    %178 = arith.mulf %175, %177 : vector<8x256xf32>
    %179 = arith.addf %159, %178 : vector<8x256xf32>
    %c222_i32 = arith.constant 222 : i32
    %180 = tpu.dynamic_rotate %62 by %c222_i32 dim 1 : vector<8x256xf32>, i32 -> vector<8x256xf32>
    %c24 = arith.constant 24 : index
    %c0_95 = arith.constant 0 : index
    %c0_96 = arith.constant 0 : index
    %181 = vector.load %arg6[%c24, %c0_95, %c0_96] : memref<25x8x256xf32, #tpu.memory_space<vmem>>, vector<1x8x256xf32>
    %182 = vector.shape_cast %181 : vector<1x8x256xf32> to vector<8x256xf32>
    %183 = arith.mulf %180, %182 : vector<8x256xf32>
    %184 = arith.addf %164, %183 : vector<8x256xf32>
    %185 = arith.addf %184, %169 : vector<8x256xf32>
    %186 = arith.addf %174, %179 : vector<8x256xf32>
    %187 = arith.addf %185, %186 : vector<8x256xf32>
    %c0_97 = arith.constant 0 : index
    %c0_98 = arith.constant 0 : index
    %188 = vector.load %arg7[%c0_97, %c0_98] : memref<8x1xf32, #tpu.memory_space<vmem>>, vector<8x1xf32>
    %189 = vector.broadcast %188 : vector<8x1xf32> to vector<8x256xf32>
    %190 = arith.addf %187, %189 : vector<8x256xf32>
    %cst_99 = arith.constant 0.000000e+00 : f32
    %191 = vector.broadcast %cst_99 : f32 to vector<8x256xf32>
    %192 = arith.subf %191, %190 : vector<8x256xf32>
    %193 = math.exp %192 : vector<8x256xf32>
    %cst_100 = arith.constant 1.000000e+00 : f32
    %194 = vector.broadcast %cst_100 : f32 to vector<8x256xf32>
    %195 = arith.addf %194, %193 : vector<8x256xf32>
    %cst_101 = arith.constant 1.000000e+00 : f32
    %196 = vector.broadcast %cst_101 : f32 to vector<8x256xf32>
    %197 = arith.divf %196, %195 : vector<8x256xf32>
    %198 = arith.mulf %190, %197 : vector<8x256xf32>
    %199 = vector.extract_strided_slice %6 {offsets = [24, 0], sizes = [8, 256], strides = [1, 1]} : vector<48x256xf32> to vector<8x256xf32>
    %200 = arith.mulf %198, %199 : vector<8x256xf32>
    %c51_i32 = arith.constant 51 : i32
    %201 = tpu.dynamic_rotate %198 by %c51_i32 dim 1 : vector<8x256xf32>, i32 -> vector<8x256xf32>
    %c0_102 = arith.constant 0 : index
    %c0_103 = arith.constant 0 : index
    %c0_104 = arith.constant 0 : index
    %202 = vector.load %arg8[%c0_102, %c0_103, %c0_104] : memref<49x8x256xf32, #tpu.memory_space<vmem>>, vector<1x8x256xf32>
    %203 = vector.shape_cast %202 : vector<1x8x256xf32> to vector<8x256xf32>
    %204 = arith.mulf %201, %203 : vector<8x256xf32>
    %c50_i32 = arith.constant 50 : i32
    %205 = tpu.dynamic_rotate %198 by %c50_i32 dim 1 : vector<8x256xf32>, i32 -> vector<8x256xf32>
    %c1_105 = arith.constant 1 : index
    %c0_106 = arith.constant 0 : index
    %c0_107 = arith.constant 0 : index
    %206 = vector.load %arg8[%c1_105, %c0_106, %c0_107] : memref<49x8x256xf32, #tpu.memory_space<vmem>>, vector<1x8x256xf32>
    %207 = vector.shape_cast %206 : vector<1x8x256xf32> to vector<8x256xf32>
    %208 = arith.mulf %205, %207 : vector<8x256xf32>
    %c49_i32 = arith.constant 49 : i32
    %209 = tpu.dynamic_rotate %198 by %c49_i32 dim 1 : vector<8x256xf32>, i32 -> vector<8x256xf32>
    %c2_108 = arith.constant 2 : index
    %c0_109 = arith.constant 0 : index
    %c0_110 = arith.constant 0 : index
    %210 = vector.load %arg8[%c2_108, %c0_109, %c0_110] : memref<49x8x256xf32, #tpu.memory_space<vmem>>, vector<1x8x256xf32>
    %211 = vector.shape_cast %210 : vector<1x8x256xf32> to vector<8x256xf32>
    %212 = arith.mulf %209, %211 : vector<8x256xf32>
    %c48_i32 = arith.constant 48 : i32
    %213 = tpu.dynamic_rotate %198 by %c48_i32 dim 1 : vector<8x256xf32>, i32 -> vector<8x256xf32>
    %c3_111 = arith.constant 3 : index
    %c0_112 = arith.constant 0 : index
    %c0_113 = arith.constant 0 : index
    %214 = vector.load %arg8[%c3_111, %c0_112, %c0_113] : memref<49x8x256xf32, #tpu.memory_space<vmem>>, vector<1x8x256xf32>
    %215 = vector.shape_cast %214 : vector<1x8x256xf32> to vector<8x256xf32>
    %216 = arith.mulf %213, %215 : vector<8x256xf32>
    %c47_i32 = arith.constant 47 : i32
    %217 = tpu.dynamic_rotate %198 by %c47_i32 dim 1 : vector<8x256xf32>, i32 -> vector<8x256xf32>
    %c4_114 = arith.constant 4 : index
    %c0_115 = arith.constant 0 : index
    %c0_116 = arith.constant 0 : index
    %218 = vector.load %arg8[%c4_114, %c0_115, %c0_116] : memref<49x8x256xf32, #tpu.memory_space<vmem>>, vector<1x8x256xf32>
    %219 = vector.shape_cast %218 : vector<1x8x256xf32> to vector<8x256xf32>
    %220 = arith.mulf %217, %219 : vector<8x256xf32>
    %221 = arith.addf %204, %220 : vector<8x256xf32>
    %c46_i32 = arith.constant 46 : i32
    %222 = tpu.dynamic_rotate %198 by %c46_i32 dim 1 : vector<8x256xf32>, i32 -> vector<8x256xf32>
    %c5_117 = arith.constant 5 : index
    %c0_118 = arith.constant 0 : index
    %c0_119 = arith.constant 0 : index
    %223 = vector.load %arg8[%c5_117, %c0_118, %c0_119] : memref<49x8x256xf32, #tpu.memory_space<vmem>>, vector<1x8x256xf32>
    %224 = vector.shape_cast %223 : vector<1x8x256xf32> to vector<8x256xf32>
    %225 = arith.mulf %222, %224 : vector<8x256xf32>
    %226 = arith.addf %208, %225 : vector<8x256xf32>
    %c45_i32 = arith.constant 45 : i32
    %227 = tpu.dynamic_rotate %198 by %c45_i32 dim 1 : vector<8x256xf32>, i32 -> vector<8x256xf32>
    %c6_120 = arith.constant 6 : index
    %c0_121 = arith.constant 0 : index
    %c0_122 = arith.constant 0 : index
    %228 = vector.load %arg8[%c6_120, %c0_121, %c0_122] : memref<49x8x256xf32, #tpu.memory_space<vmem>>, vector<1x8x256xf32>
    %229 = vector.shape_cast %228 : vector<1x8x256xf32> to vector<8x256xf32>
    %230 = arith.mulf %227, %229 : vector<8x256xf32>
    %231 = arith.addf %212, %230 : vector<8x256xf32>
    %c35_i32 = arith.constant 35 : i32
    %232 = tpu.dynamic_rotate %198 by %c35_i32 dim 1 : vector<8x256xf32>, i32 -> vector<8x256xf32>
    %c7_123 = arith.constant 7 : index
    %c0_124 = arith.constant 0 : index
    %c0_125 = arith.constant 0 : index
    %233 = vector.load %arg8[%c7_123, %c0_124, %c0_125] : memref<49x8x256xf32, #tpu.memory_space<vmem>>, vector<1x8x256xf32>
    %234 = vector.shape_cast %233 : vector<1x8x256xf32> to vector<8x256xf32>
    %235 = arith.mulf %232, %234 : vector<8x256xf32>
    %236 = arith.addf %216, %235 : vector<8x256xf32>
    %c34_i32_126 = arith.constant 34 : i32
    %237 = tpu.dynamic_rotate %198 by %c34_i32_126 dim 1 : vector<8x256xf32>, i32 -> vector<8x256xf32>
    %c8_127 = arith.constant 8 : index
    %c0_128 = arith.constant 0 : index
    %c0_129 = arith.constant 0 : index
    %238 = vector.load %arg8[%c8_127, %c0_128, %c0_129] : memref<49x8x256xf32, #tpu.memory_space<vmem>>, vector<1x8x256xf32>
    %239 = vector.shape_cast %238 : vector<1x8x256xf32> to vector<8x256xf32>
    %240 = arith.mulf %237, %239 : vector<8x256xf32>
    %241 = arith.addf %221, %240 : vector<8x256xf32>
    %c33_i32_130 = arith.constant 33 : i32
    %242 = tpu.dynamic_rotate %198 by %c33_i32_130 dim 1 : vector<8x256xf32>, i32 -> vector<8x256xf32>
    %c9_131 = arith.constant 9 : index
    %c0_132 = arith.constant 0 : index
    %c0_133 = arith.constant 0 : index
    %243 = vector.load %arg8[%c9_131, %c0_132, %c0_133] : memref<49x8x256xf32, #tpu.memory_space<vmem>>, vector<1x8x256xf32>
    %244 = vector.shape_cast %243 : vector<1x8x256xf32> to vector<8x256xf32>
    %245 = arith.mulf %242, %244 : vector<8x256xf32>
    %246 = arith.addf %226, %245 : vector<8x256xf32>
    %c32_i32_134 = arith.constant 32 : i32
    %247 = tpu.dynamic_rotate %198 by %c32_i32_134 dim 1 : vector<8x256xf32>, i32 -> vector<8x256xf32>
    %c10_135 = arith.constant 10 : index
    %c0_136 = arith.constant 0 : index
    %c0_137 = arith.constant 0 : index
    %248 = vector.load %arg8[%c10_135, %c0_136, %c0_137] : memref<49x8x256xf32, #tpu.memory_space<vmem>>, vector<1x8x256xf32>
    %249 = vector.shape_cast %248 : vector<1x8x256xf32> to vector<8x256xf32>
    %250 = arith.mulf %247, %249 : vector<8x256xf32>
    %251 = arith.addf %231, %250 : vector<8x256xf32>
    %c31_i32_138 = arith.constant 31 : i32
    %252 = tpu.dynamic_rotate %198 by %c31_i32_138 dim 1 : vector<8x256xf32>, i32 -> vector<8x256xf32>
    %c11_139 = arith.constant 11 : index
    %c0_140 = arith.constant 0 : index
    %c0_141 = arith.constant 0 : index
    %253 = vector.load %arg8[%c11_139, %c0_140, %c0_141] : memref<49x8x256xf32, #tpu.memory_space<vmem>>, vector<1x8x256xf32>
    %254 = vector.shape_cast %253 : vector<1x8x256xf32> to vector<8x256xf32>
    %255 = arith.mulf %252, %254 : vector<8x256xf32>
    %256 = arith.addf %236, %255 : vector<8x256xf32>
    %c30_i32_142 = arith.constant 30 : i32
    %257 = tpu.dynamic_rotate %198 by %c30_i32_142 dim 1 : vector<8x256xf32>, i32 -> vector<8x256xf32>
    %c12_143 = arith.constant 12 : index
    %c0_144 = arith.constant 0 : index
    %c0_145 = arith.constant 0 : index
    %258 = vector.load %arg8[%c12_143, %c0_144, %c0_145] : memref<49x8x256xf32, #tpu.memory_space<vmem>>, vector<1x8x256xf32>
    %259 = vector.shape_cast %258 : vector<1x8x256xf32> to vector<8x256xf32>
    %260 = arith.mulf %257, %259 : vector<8x256xf32>
    %261 = arith.addf %241, %260 : vector<8x256xf32>
    %c29_i32 = arith.constant 29 : i32
    %262 = tpu.dynamic_rotate %198 by %c29_i32 dim 1 : vector<8x256xf32>, i32 -> vector<8x256xf32>
    %c13_146 = arith.constant 13 : index
    %c0_147 = arith.constant 0 : index
    %c0_148 = arith.constant 0 : index
    %263 = vector.load %arg8[%c13_146, %c0_147, %c0_148] : memref<49x8x256xf32, #tpu.memory_space<vmem>>, vector<1x8x256xf32>
    %264 = vector.shape_cast %263 : vector<1x8x256xf32> to vector<8x256xf32>
    %265 = arith.mulf %262, %264 : vector<8x256xf32>
    %266 = arith.addf %246, %265 : vector<8x256xf32>
    %c19_i32 = arith.constant 19 : i32
    %267 = tpu.dynamic_rotate %198 by %c19_i32 dim 1 : vector<8x256xf32>, i32 -> vector<8x256xf32>
    %c14_149 = arith.constant 14 : index
    %c0_150 = arith.constant 0 : index
    %c0_151 = arith.constant 0 : index
    %268 = vector.load %arg8[%c14_149, %c0_150, %c0_151] : memref<49x8x256xf32, #tpu.memory_space<vmem>>, vector<1x8x256xf32>
    %269 = vector.shape_cast %268 : vector<1x8x256xf32> to vector<8x256xf32>
    %270 = arith.mulf %267, %269 : vector<8x256xf32>
    %271 = arith.addf %251, %270 : vector<8x256xf32>
    %c18_i32_152 = arith.constant 18 : i32
    %272 = tpu.dynamic_rotate %198 by %c18_i32_152 dim 1 : vector<8x256xf32>, i32 -> vector<8x256xf32>
    %c15_153 = arith.constant 15 : index
    %c0_154 = arith.constant 0 : index
    %c0_155 = arith.constant 0 : index
    %273 = vector.load %arg8[%c15_153, %c0_154, %c0_155] : memref<49x8x256xf32, #tpu.memory_space<vmem>>, vector<1x8x256xf32>
    %274 = vector.shape_cast %273 : vector<1x8x256xf32> to vector<8x256xf32>
    %275 = arith.mulf %272, %274 : vector<8x256xf32>
    %276 = arith.addf %256, %275 : vector<8x256xf32>
    %c17_i32_156 = arith.constant 17 : i32
    %277 = tpu.dynamic_rotate %198 by %c17_i32_156 dim 1 : vector<8x256xf32>, i32 -> vector<8x256xf32>
    %c16_157 = arith.constant 16 : index
    %c0_158 = arith.constant 0 : index
    %c0_159 = arith.constant 0 : index
    %278 = vector.load %arg8[%c16_157, %c0_158, %c0_159] : memref<49x8x256xf32, #tpu.memory_space<vmem>>, vector<1x8x256xf32>
    %279 = vector.shape_cast %278 : vector<1x8x256xf32> to vector<8x256xf32>
    %280 = arith.mulf %277, %279 : vector<8x256xf32>
    %281 = arith.addf %261, %280 : vector<8x256xf32>
    %c16_i32_160 = arith.constant 16 : i32
    %282 = tpu.dynamic_rotate %198 by %c16_i32_160 dim 1 : vector<8x256xf32>, i32 -> vector<8x256xf32>
    %c17_161 = arith.constant 17 : index
    %c0_162 = arith.constant 0 : index
    %c0_163 = arith.constant 0 : index
    %283 = vector.load %arg8[%c17_161, %c0_162, %c0_163] : memref<49x8x256xf32, #tpu.memory_space<vmem>>, vector<1x8x256xf32>
    %284 = vector.shape_cast %283 : vector<1x8x256xf32> to vector<8x256xf32>
    %285 = arith.mulf %282, %284 : vector<8x256xf32>
    %286 = arith.addf %266, %285 : vector<8x256xf32>
    %c15_i32_164 = arith.constant 15 : i32
    %287 = tpu.dynamic_rotate %198 by %c15_i32_164 dim 1 : vector<8x256xf32>, i32 -> vector<8x256xf32>
    %c18_165 = arith.constant 18 : index
    %c0_166 = arith.constant 0 : index
    %c0_167 = arith.constant 0 : index
    %288 = vector.load %arg8[%c18_165, %c0_166, %c0_167] : memref<49x8x256xf32, #tpu.memory_space<vmem>>, vector<1x8x256xf32>
    %289 = vector.shape_cast %288 : vector<1x8x256xf32> to vector<8x256xf32>
    %290 = arith.mulf %287, %289 : vector<8x256xf32>
    %291 = arith.addf %271, %290 : vector<8x256xf32>
    %c14_i32_168 = arith.constant 14 : i32
    %292 = tpu.dynamic_rotate %198 by %c14_i32_168 dim 1 : vector<8x256xf32>, i32 -> vector<8x256xf32>
    %c19_169 = arith.constant 19 : index
    %c0_170 = arith.constant 0 : index
    %c0_171 = arith.constant 0 : index
    %293 = vector.load %arg8[%c19_169, %c0_170, %c0_171] : memref<49x8x256xf32, #tpu.memory_space<vmem>>, vector<1x8x256xf32>
    %294 = vector.shape_cast %293 : vector<1x8x256xf32> to vector<8x256xf32>
    %295 = arith.mulf %292, %294 : vector<8x256xf32>
    %296 = arith.addf %276, %295 : vector<8x256xf32>
    %c13_i32 = arith.constant 13 : i32
    %297 = tpu.dynamic_rotate %198 by %c13_i32 dim 1 : vector<8x256xf32>, i32 -> vector<8x256xf32>
    %c20_172 = arith.constant 20 : index
    %c0_173 = arith.constant 0 : index
    %c0_174 = arith.constant 0 : index
    %298 = vector.load %arg8[%c20_172, %c0_173, %c0_174] : memref<49x8x256xf32, #tpu.memory_space<vmem>>, vector<1x8x256xf32>
    %299 = vector.shape_cast %298 : vector<1x8x256xf32> to vector<8x256xf32>
    %300 = arith.mulf %297, %299 : vector<8x256xf32>
    %301 = arith.addf %281, %300 : vector<8x256xf32>
    %c3_i32 = arith.constant 3 : i32
    %302 = tpu.dynamic_rotate %198 by %c3_i32 dim 1 : vector<8x256xf32>, i32 -> vector<8x256xf32>
    %c21_175 = arith.constant 21 : index
    %c0_176 = arith.constant 0 : index
    %c0_177 = arith.constant 0 : index
    %303 = vector.load %arg8[%c21_175, %c0_176, %c0_177] : memref<49x8x256xf32, #tpu.memory_space<vmem>>, vector<1x8x256xf32>
    %304 = vector.shape_cast %303 : vector<1x8x256xf32> to vector<8x256xf32>
    %305 = arith.mulf %302, %304 : vector<8x256xf32>
    %306 = arith.addf %286, %305 : vector<8x256xf32>
    %c2_i32_178 = arith.constant 2 : i32
    %307 = tpu.dynamic_rotate %198 by %c2_i32_178 dim 1 : vector<8x256xf32>, i32 -> vector<8x256xf32>
    %c22_179 = arith.constant 22 : index
    %c0_180 = arith.constant 0 : index
    %c0_181 = arith.constant 0 : index
    %308 = vector.load %arg8[%c22_179, %c0_180, %c0_181] : memref<49x8x256xf32, #tpu.memory_space<vmem>>, vector<1x8x256xf32>
    %309 = vector.shape_cast %308 : vector<1x8x256xf32> to vector<8x256xf32>
    %310 = arith.mulf %307, %309 : vector<8x256xf32>
    %311 = arith.addf %291, %310 : vector<8x256xf32>
    %c1_i32_182 = arith.constant 1 : i32
    %312 = tpu.dynamic_rotate %198 by %c1_i32_182 dim 1 : vector<8x256xf32>, i32 -> vector<8x256xf32>
    %c23_183 = arith.constant 23 : index
    %c0_184 = arith.constant 0 : index
    %c0_185 = arith.constant 0 : index
    %313 = vector.load %arg8[%c23_183, %c0_184, %c0_185] : memref<49x8x256xf32, #tpu.memory_space<vmem>>, vector<1x8x256xf32>
    %314 = vector.shape_cast %313 : vector<1x8x256xf32> to vector<8x256xf32>
    %315 = arith.mulf %312, %314 : vector<8x256xf32>
    %316 = arith.addf %296, %315 : vector<8x256xf32>
    %c24_186 = arith.constant 24 : index
    %c0_187 = arith.constant 0 : index
    %c0_188 = arith.constant 0 : index
    %317 = vector.load %arg8[%c24_186, %c0_187, %c0_188] : memref<49x8x256xf32, #tpu.memory_space<vmem>>, vector<1x8x256xf32>
    %318 = vector.shape_cast %317 : vector<1x8x256xf32> to vector<8x256xf32>
    %319 = arith.mulf %198, %318 : vector<8x256xf32>
    %320 = arith.addf %301, %319 : vector<8x256xf32>
    %c255_i32_189 = arith.constant 255 : i32
    %321 = tpu.dynamic_rotate %198 by %c255_i32_189 dim 1 : vector<8x256xf32>, i32 -> vector<8x256xf32>
    %c25 = arith.constant 25 : index
    %c0_190 = arith.constant 0 : index
    %c0_191 = arith.constant 0 : index
    %322 = vector.load %arg8[%c25, %c0_190, %c0_191] : memref<49x8x256xf32, #tpu.memory_space<vmem>>, vector<1x8x256xf32>
    %323 = vector.shape_cast %322 : vector<1x8x256xf32> to vector<8x256xf32>
    %324 = arith.mulf %321, %323 : vector<8x256xf32>
    %325 = arith.addf %306, %324 : vector<8x256xf32>
    %c254_i32_192 = arith.constant 254 : i32
    %326 = tpu.dynamic_rotate %198 by %c254_i32_192 dim 1 : vector<8x256xf32>, i32 -> vector<8x256xf32>
    %c26 = arith.constant 26 : index
    %c0_193 = arith.constant 0 : index
    %c0_194 = arith.constant 0 : index
    %327 = vector.load %arg8[%c26, %c0_193, %c0_194] : memref<49x8x256xf32, #tpu.memory_space<vmem>>, vector<1x8x256xf32>
    %328 = vector.shape_cast %327 : vector<1x8x256xf32> to vector<8x256xf32>
    %329 = arith.mulf %326, %328 : vector<8x256xf32>
    %330 = arith.addf %311, %329 : vector<8x256xf32>
    %c253_i32 = arith.constant 253 : i32
    %331 = tpu.dynamic_rotate %198 by %c253_i32 dim 1 : vector<8x256xf32>, i32 -> vector<8x256xf32>
    %c27 = arith.constant 27 : index
    %c0_195 = arith.constant 0 : index
    %c0_196 = arith.constant 0 : index
    %332 = vector.load %arg8[%c27, %c0_195, %c0_196] : memref<49x8x256xf32, #tpu.memory_space<vmem>>, vector<1x8x256xf32>
    %333 = vector.shape_cast %332 : vector<1x8x256xf32> to vector<8x256xf32>
    %334 = arith.mulf %331, %333 : vector<8x256xf32>
    %335 = arith.addf %316, %334 : vector<8x256xf32>
    %c243_i32 = arith.constant 243 : i32
    %336 = tpu.dynamic_rotate %198 by %c243_i32 dim 1 : vector<8x256xf32>, i32 -> vector<8x256xf32>
    %c28 = arith.constant 28 : index
    %c0_197 = arith.constant 0 : index
    %c0_198 = arith.constant 0 : index
    %337 = vector.load %arg8[%c28, %c0_197, %c0_198] : memref<49x8x256xf32, #tpu.memory_space<vmem>>, vector<1x8x256xf32>
    %338 = vector.shape_cast %337 : vector<1x8x256xf32> to vector<8x256xf32>
    %339 = arith.mulf %336, %338 : vector<8x256xf32>
    %340 = arith.addf %320, %339 : vector<8x256xf32>
    %c242_i32_199 = arith.constant 242 : i32
    %341 = tpu.dynamic_rotate %198 by %c242_i32_199 dim 1 : vector<8x256xf32>, i32 -> vector<8x256xf32>
    %c29 = arith.constant 29 : index
    %c0_200 = arith.constant 0 : index
    %c0_201 = arith.constant 0 : index
    %342 = vector.load %arg8[%c29, %c0_200, %c0_201] : memref<49x8x256xf32, #tpu.memory_space<vmem>>, vector<1x8x256xf32>
    %343 = vector.shape_cast %342 : vector<1x8x256xf32> to vector<8x256xf32>
    %344 = arith.mulf %341, %343 : vector<8x256xf32>
    %345 = arith.addf %325, %344 : vector<8x256xf32>
    %c241_i32_202 = arith.constant 241 : i32
    %346 = tpu.dynamic_rotate %198 by %c241_i32_202 dim 1 : vector<8x256xf32>, i32 -> vector<8x256xf32>
    %c30 = arith.constant 30 : index
    %c0_203 = arith.constant 0 : index
    %c0_204 = arith.constant 0 : index
    %347 = vector.load %arg8[%c30, %c0_203, %c0_204] : memref<49x8x256xf32, #tpu.memory_space<vmem>>, vector<1x8x256xf32>
    %348 = vector.shape_cast %347 : vector<1x8x256xf32> to vector<8x256xf32>
    %349 = arith.mulf %346, %348 : vector<8x256xf32>
    %350 = arith.addf %330, %349 : vector<8x256xf32>
    %c240_i32_205 = arith.constant 240 : i32
    %351 = tpu.dynamic_rotate %198 by %c240_i32_205 dim 1 : vector<8x256xf32>, i32 -> vector<8x256xf32>
    %c31 = arith.constant 31 : index
    %c0_206 = arith.constant 0 : index
    %c0_207 = arith.constant 0 : index
    %352 = vector.load %arg8[%c31, %c0_206, %c0_207] : memref<49x8x256xf32, #tpu.memory_space<vmem>>, vector<1x8x256xf32>
    %353 = vector.shape_cast %352 : vector<1x8x256xf32> to vector<8x256xf32>
    %354 = arith.mulf %351, %353 : vector<8x256xf32>
    %355 = arith.addf %335, %354 : vector<8x256xf32>
    %c239_i32_208 = arith.constant 239 : i32
    %356 = tpu.dynamic_rotate %198 by %c239_i32_208 dim 1 : vector<8x256xf32>, i32 -> vector<8x256xf32>
    %c32 = arith.constant 32 : index
    %c0_209 = arith.constant 0 : index
    %c0_210 = arith.constant 0 : index
    %357 = vector.load %arg8[%c32, %c0_209, %c0_210] : memref<49x8x256xf32, #tpu.memory_space<vmem>>, vector<1x8x256xf32>
    %358 = vector.shape_cast %357 : vector<1x8x256xf32> to vector<8x256xf32>
    %359 = arith.mulf %356, %358 : vector<8x256xf32>
    %360 = arith.addf %340, %359 : vector<8x256xf32>
    %c238_i32_211 = arith.constant 238 : i32
    %361 = tpu.dynamic_rotate %198 by %c238_i32_211 dim 1 : vector<8x256xf32>, i32 -> vector<8x256xf32>
    %c33 = arith.constant 33 : index
    %c0_212 = arith.constant 0 : index
    %c0_213 = arith.constant 0 : index
    %362 = vector.load %arg8[%c33, %c0_212, %c0_213] : memref<49x8x256xf32, #tpu.memory_space<vmem>>, vector<1x8x256xf32>
    %363 = vector.shape_cast %362 : vector<1x8x256xf32> to vector<8x256xf32>
    %364 = arith.mulf %361, %363 : vector<8x256xf32>
    %365 = arith.addf %345, %364 : vector<8x256xf32>
    %c237_i32 = arith.constant 237 : i32
    %366 = tpu.dynamic_rotate %198 by %c237_i32 dim 1 : vector<8x256xf32>, i32 -> vector<8x256xf32>
    %c34 = arith.constant 34 : index
    %c0_214 = arith.constant 0 : index
    %c0_215 = arith.constant 0 : index
    %367 = vector.load %arg8[%c34, %c0_214, %c0_215] : memref<49x8x256xf32, #tpu.memory_space<vmem>>, vector<1x8x256xf32>
    %368 = vector.shape_cast %367 : vector<1x8x256xf32> to vector<8x256xf32>
    %369 = arith.mulf %366, %368 : vector<8x256xf32>
    %370 = arith.addf %350, %369 : vector<8x256xf32>
    %c227_i32 = arith.constant 227 : i32
    %371 = tpu.dynamic_rotate %198 by %c227_i32 dim 1 : vector<8x256xf32>, i32 -> vector<8x256xf32>
    %c35 = arith.constant 35 : index
    %c0_216 = arith.constant 0 : index
    %c0_217 = arith.constant 0 : index
    %372 = vector.load %arg8[%c35, %c0_216, %c0_217] : memref<49x8x256xf32, #tpu.memory_space<vmem>>, vector<1x8x256xf32>
    %373 = vector.shape_cast %372 : vector<1x8x256xf32> to vector<8x256xf32>
    %374 = arith.mulf %371, %373 : vector<8x256xf32>
    %375 = arith.addf %355, %374 : vector<8x256xf32>
    %c226_i32_218 = arith.constant 226 : i32
    %376 = tpu.dynamic_rotate %198 by %c226_i32_218 dim 1 : vector<8x256xf32>, i32 -> vector<8x256xf32>
    %c36 = arith.constant 36 : index
    %c0_219 = arith.constant 0 : index
    %c0_220 = arith.constant 0 : index
    %377 = vector.load %arg8[%c36, %c0_219, %c0_220] : memref<49x8x256xf32, #tpu.memory_space<vmem>>, vector<1x8x256xf32>
    %378 = vector.shape_cast %377 : vector<1x8x256xf32> to vector<8x256xf32>
    %379 = arith.mulf %376, %378 : vector<8x256xf32>
    %380 = arith.addf %360, %379 : vector<8x256xf32>
    %c225_i32_221 = arith.constant 225 : i32
    %381 = tpu.dynamic_rotate %198 by %c225_i32_221 dim 1 : vector<8x256xf32>, i32 -> vector<8x256xf32>
    %c37 = arith.constant 37 : index
    %c0_222 = arith.constant 0 : index
    %c0_223 = arith.constant 0 : index
    %382 = vector.load %arg8[%c37, %c0_222, %c0_223] : memref<49x8x256xf32, #tpu.memory_space<vmem>>, vector<1x8x256xf32>
    %383 = vector.shape_cast %382 : vector<1x8x256xf32> to vector<8x256xf32>
    %384 = arith.mulf %381, %383 : vector<8x256xf32>
    %385 = arith.addf %365, %384 : vector<8x256xf32>
    %c224_i32_224 = arith.constant 224 : i32
    %386 = tpu.dynamic_rotate %198 by %c224_i32_224 dim 1 : vector<8x256xf32>, i32 -> vector<8x256xf32>
    %c38 = arith.constant 38 : index
    %c0_225 = arith.constant 0 : index
    %c0_226 = arith.constant 0 : index
    %387 = vector.load %arg8[%c38, %c0_225, %c0_226] : memref<49x8x256xf32, #tpu.memory_space<vmem>>, vector<1x8x256xf32>
    %388 = vector.shape_cast %387 : vector<1x8x256xf32> to vector<8x256xf32>
    %389 = arith.mulf %386, %388 : vector<8x256xf32>
    %390 = arith.addf %370, %389 : vector<8x256xf32>
    %c223_i32_227 = arith.constant 223 : i32
    %391 = tpu.dynamic_rotate %198 by %c223_i32_227 dim 1 : vector<8x256xf32>, i32 -> vector<8x256xf32>
    %c39 = arith.constant 39 : index
    %c0_228 = arith.constant 0 : index
    %c0_229 = arith.constant 0 : index
    %392 = vector.load %arg8[%c39, %c0_228, %c0_229] : memref<49x8x256xf32, #tpu.memory_space<vmem>>, vector<1x8x256xf32>
    %393 = vector.shape_cast %392 : vector<1x8x256xf32> to vector<8x256xf32>
    %394 = arith.mulf %391, %393 : vector<8x256xf32>
    %395 = arith.addf %375, %394 : vector<8x256xf32>
    %c222_i32_230 = arith.constant 222 : i32
    %396 = tpu.dynamic_rotate %198 by %c222_i32_230 dim 1 : vector<8x256xf32>, i32 -> vector<8x256xf32>
    %c40 = arith.constant 40 : index
    %c0_231 = arith.constant 0 : index
    %c0_232 = arith.constant 0 : index
    %397 = vector.load %arg8[%c40, %c0_231, %c0_232] : memref<49x8x256xf32, #tpu.memory_space<vmem>>, vector<1x8x256xf32>
    %398 = vector.shape_cast %397 : vector<1x8x256xf32> to vector<8x256xf32>
    %399 = arith.mulf %396, %398 : vector<8x256xf32>
    %400 = arith.addf %380, %399 : vector<8x256xf32>
    %c221_i32 = arith.constant 221 : i32
    %401 = tpu.dynamic_rotate %198 by %c221_i32 dim 1 : vector<8x256xf32>, i32 -> vector<8x256xf32>
    %c41 = arith.constant 41 : index
    %c0_233 = arith.constant 0 : index
    %c0_234 = arith.constant 0 : index
    %402 = vector.load %arg8[%c41, %c0_233, %c0_234] : memref<49x8x256xf32, #tpu.memory_space<vmem>>, vector<1x8x256xf32>
    %403 = vector.shape_cast %402 : vector<1x8x256xf32> to vector<8x256xf32>
    %404 = arith.mulf %401, %403 : vector<8x256xf32>
    %405 = arith.addf %385, %404 : vector<8x256xf32>
    %c211_i32 = arith.constant 211 : i32
    %406 = tpu.dynamic_rotate %198 by %c211_i32 dim 1 : vector<8x256xf32>, i32 -> vector<8x256xf32>
    %c42 = arith.constant 42 : index
    %c0_235 = arith.constant 0 : index
    %c0_236 = arith.constant 0 : index
    %407 = vector.load %arg8[%c42, %c0_235, %c0_236] : memref<49x8x256xf32, #tpu.memory_space<vmem>>, vector<1x8x256xf32>
    %408 = vector.shape_cast %407 : vector<1x8x256xf32> to vector<8x256xf32>
    %409 = arith.mulf %406, %408 : vector<8x256xf32>
    %410 = arith.addf %390, %409 : vector<8x256xf32>
    %c210_i32 = arith.constant 210 : i32
    %411 = tpu.dynamic_rotate %198 by %c210_i32 dim 1 : vector<8x256xf32>, i32 -> vector<8x256xf32>
    %c43 = arith.constant 43 : index
    %c0_237 = arith.constant 0 : index
    %c0_238 = arith.constant 0 : index
    %412 = vector.load %arg8[%c43, %c0_237, %c0_238] : memref<49x8x256xf32, #tpu.memory_space<vmem>>, vector<1x8x256xf32>
    %413 = vector.shape_cast %412 : vector<1x8x256xf32> to vector<8x256xf32>
    %414 = arith.mulf %411, %413 : vector<8x256xf32>
    %415 = arith.addf %395, %414 : vector<8x256xf32>
    %c209_i32 = arith.constant 209 : i32
    %416 = tpu.dynamic_rotate %198 by %c209_i32 dim 1 : vector<8x256xf32>, i32 -> vector<8x256xf32>
    %c44 = arith.constant 44 : index
    %c0_239 = arith.constant 0 : index
    %c0_240 = arith.constant 0 : index
    %417 = vector.load %arg8[%c44, %c0_239, %c0_240] : memref<49x8x256xf32, #tpu.memory_space<vmem>>, vector<1x8x256xf32>
    %418 = vector.shape_cast %417 : vector<1x8x256xf32> to vector<8x256xf32>
    %419 = arith.mulf %416, %418 : vector<8x256xf32>
    %420 = arith.addf %400, %419 : vector<8x256xf32>
    %c208_i32 = arith.constant 208 : i32
    %421 = tpu.dynamic_rotate %198 by %c208_i32 dim 1 : vector<8x256xf32>, i32 -> vector<8x256xf32>
    %c45 = arith.constant 45 : index
    %c0_241 = arith.constant 0 : index
    %c0_242 = arith.constant 0 : index
    %422 = vector.load %arg8[%c45, %c0_241, %c0_242] : memref<49x8x256xf32, #tpu.memory_space<vmem>>, vector<1x8x256xf32>
    %423 = vector.shape_cast %422 : vector<1x8x256xf32> to vector<8x256xf32>
    %424 = arith.mulf %421, %423 : vector<8x256xf32>
    %425 = arith.addf %405, %424 : vector<8x256xf32>
    %c207_i32 = arith.constant 207 : i32
    %426 = tpu.dynamic_rotate %198 by %c207_i32 dim 1 : vector<8x256xf32>, i32 -> vector<8x256xf32>
    %c46 = arith.constant 46 : index
    %c0_243 = arith.constant 0 : index
    %c0_244 = arith.constant 0 : index
    %427 = vector.load %arg8[%c46, %c0_243, %c0_244] : memref<49x8x256xf32, #tpu.memory_space<vmem>>, vector<1x8x256xf32>
    %428 = vector.shape_cast %427 : vector<1x8x256xf32> to vector<8x256xf32>
    %429 = arith.mulf %426, %428 : vector<8x256xf32>
    %430 = arith.addf %410, %429 : vector<8x256xf32>
    %c206_i32 = arith.constant 206 : i32
    %431 = tpu.dynamic_rotate %198 by %c206_i32 dim 1 : vector<8x256xf32>, i32 -> vector<8x256xf32>
    %c47 = arith.constant 47 : index
    %c0_245 = arith.constant 0 : index
    %c0_246 = arith.constant 0 : index
    %432 = vector.load %arg8[%c47, %c0_245, %c0_246] : memref<49x8x256xf32, #tpu.memory_space<vmem>>, vector<1x8x256xf32>
    %433 = vector.shape_cast %432 : vector<1x8x256xf32> to vector<8x256xf32>
    %434 = arith.mulf %431, %433 : vector<8x256xf32>
    %435 = arith.addf %415, %434 : vector<8x256xf32>
    %c205_i32 = arith.constant 205 : i32
    %436 = tpu.dynamic_rotate %198 by %c205_i32 dim 1 : vector<8x256xf32>, i32 -> vector<8x256xf32>
    %c48 = arith.constant 48 : index
    %c0_247 = arith.constant 0 : index
    %c0_248 = arith.constant 0 : index
    %437 = vector.load %arg8[%c48, %c0_247, %c0_248] : memref<49x8x256xf32, #tpu.memory_space<vmem>>, vector<1x8x256xf32>
    %438 = vector.shape_cast %437 : vector<1x8x256xf32> to vector<8x256xf32>
    %439 = arith.mulf %436, %438 : vector<8x256xf32>
    %440 = arith.addf %420, %439 : vector<8x256xf32>
    %441 = arith.addf %440, %425 : vector<8x256xf32>
    %442 = arith.addf %430, %435 : vector<8x256xf32>
    %443 = arith.addf %441, %442 : vector<8x256xf32>
    %c0_249 = arith.constant 0 : index
    %c0_250 = arith.constant 0 : index
    %444 = vector.load %arg9[%c0_249, %c0_250] : memref<8x1xf32, #tpu.memory_space<vmem>>, vector<8x1xf32>
    %445 = vector.broadcast %444 : vector<8x1xf32> to vector<8x256xf32>
    %446 = arith.addf %443, %445 : vector<8x256xf32>
    %cst_251 = arith.constant 0.000000e+00 : f32
    %447 = vector.broadcast %cst_251 : f32 to vector<8x256xf32>
    %448 = arith.subf %447, %446 : vector<8x256xf32>
    %449 = math.exp %448 : vector<8x256xf32>
    %cst_252 = arith.constant 1.000000e+00 : f32
    %450 = vector.broadcast %cst_252 : f32 to vector<8x256xf32>
    %451 = arith.addf %450, %449 : vector<8x256xf32>
    %cst_253 = arith.constant 1.000000e+00 : f32
    %452 = vector.broadcast %cst_253 : f32 to vector<8x256xf32>
    %453 = arith.divf %452, %451 : vector<8x256xf32>
    %454 = arith.mulf %446, %453 : vector<8x256xf32>
    %455 = vector.extract_strided_slice %6 {offsets = [32, 0], sizes = [8, 256], strides = [1, 1]} : vector<48x256xf32> to vector<8x256xf32>
    %456 = arith.mulf %454, %455 : vector<8x256xf32>
    %cst_254 = arith.constant dense<0.000000e+00> : vector<8xf32>
    %457 = vector.multi_reduction <add>, %454, %cst_254 [1] : vector<8x256xf32> to vector<8xf32>
    %458 = vector.shape_cast %457 : vector<8xf32> to vector<8x1xf32>
    %cst_255 = arith.constant 3.906250e-03 : f32
    %459 = vector.broadcast %cst_255 : f32 to vector<8x1xf32>
    %460 = arith.mulf %458, %459 : vector<8x1xf32>
    %c0_256 = arith.constant 0 : index
    %c0_257 = arith.constant 0 : index
    %461 = vector.load %arg10[%c0_256, %c0_257] : memref<8x8xf32, #tpu.memory_space<vmem>>, vector<8x8xf32>
    %cst_258 = arith.constant dense<0.000000e+00> : vector<8x1xf32>
    %462 = tpu.matmul %461, %460, %cst_258 {dimension_numbers = #tpu.dot_dimension_numbers<[1], [0], [0], [1], [0, 0, 1, 1], [], []>} : vector<8x8xf32>, vector<8x1xf32>, vector<8x1xf32> -> vector<8x1xf32>
    %c0_259 = arith.constant 0 : index
    %c0_260 = arith.constant 0 : index
    %463 = vector.load %arg11[%c0_259, %c0_260] : memref<8x1xf32, #tpu.memory_space<vmem>>, vector<8x1xf32>
    %464 = arith.addf %462, %463 : vector<8x1xf32>
    %cst_261 = arith.constant 0.000000e+00 : f32
    %465 = vector.broadcast %cst_261 : f32 to vector<8x1xf32>
    %466 = arith.subf %465, %464 : vector<8x1xf32>
    %467 = math.exp %466 : vector<8x1xf32>
    %cst_262 = arith.constant 1.000000e+00 : f32
    %468 = vector.broadcast %cst_262 : f32 to vector<8x1xf32>
    %469 = arith.addf %468, %467 : vector<8x1xf32>
    %cst_263 = arith.constant 1.000000e+00 : f32
    %470 = vector.broadcast %cst_263 : f32 to vector<8x1xf32>
    %471 = arith.divf %470, %469 : vector<8x1xf32>
    %472 = arith.mulf %464, %471 : vector<8x1xf32>
    %473 = vector.extract_strided_slice %6 {offsets = [40, 0], sizes = [8, 256], strides = [1, 1]} : vector<48x256xf32> to vector<8x256xf32>
    %474 = vector.broadcast %472 : vector<8x1xf32> to vector<8x256xf32>
    %475 = arith.mulf %474, %473 : vector<8x256xf32>
    %476 = arith.addf %64, %200 : vector<8x256xf32>
    %477 = arith.addf %456, %475 : vector<8x256xf32>
    %478 = arith.addf %476, %477 : vector<8x256xf32>
    %c0_264 = arith.constant 0 : index
    %c0_265 = arith.constant 0 : index
    %479 = vector.load %arg12[%c0_264, %c0_265] : memref<16x8xf32, #tpu.memory_space<vmem>>, vector<16x8xf32>
    %480 = arith.mulf %7, %478 : vector<8x256xf32>
    %cst_266 = arith.constant dense<0.000000e+00> : vector<16x256xf32>
    %481 = tpu.matmul %479, %480, %cst_266 {dimension_numbers = #tpu.dot_dimension_numbers<[1], [0], [0], [1], [0, 0, 1, 1], [], []>} : vector<16x8xf32>, vector<8x256xf32>, vector<16x256xf32> -> vector<16x256xf32>
    %c0_267 = arith.constant 0 : index
    %c0_268 = arith.constant 0 : index
    %482 = vector.load %arg13[%c0_267, %c0_268] : memref<16x1xf32, #tpu.memory_space<vmem>>, vector<16x1xf32>
    %483 = vector.broadcast %482 : vector<16x1xf32> to vector<16x256xf32>
    %484 = arith.addf %481, %483 : vector<16x256xf32>
    %c0_269 = arith.constant 0 : index
    %c0_270 = arith.constant 0 : index
    %c0_271 = arith.constant 0 : index
    %485 = vector.load %arg14[%c0_269, %c0_270, %c0_271] : memref<1x16x256xf32, #tpu.memory_space<vmem>>, vector<1x16x256xf32>
    %486 = vector.shape_cast %485 : vector<1x16x256xf32> to vector<16x256xf32>
    %487 = vector.shape_cast %484 : vector<16x256xf32> to vector<1x16x256xf32>
    tpu.vector_store %arg14[%c0_269, %c0_270, %c0_271], %487 {strides = array<i32>} : memref<1x16x256xf32, #tpu.memory_space<vmem>>, vector<1x16x256xf32>,
    return
  }
  func.func @transform_0(%arg0: i32) -> (i32, i32, i32) {
    %c0_i32 = arith.constant 0 : i32
    %c0_i32_0 = arith.constant 0 : i32
    %c0_i32_1 = arith.constant 0 : i32
    return %arg0, %c0_i32, %c0_i32_0 : i32, i32, i32
  }
  func.func @transform_1(%arg0: i32) -> (i32, i32) {
    %c0_i32 = arith.constant 0 : i32
    %c0_i32_0 = arith.constant 0 : i32
    %c0_i32_1 = arith.constant 0 : i32
    return %c0_i32, %c0_i32_0 : i32, i32
  }
  func.func @transform_2(%arg0: i32) -> (i32, i32) {
    %c0_i32 = arith.constant 0 : i32
    %c0_i32_0 = arith.constant 0 : i32
    %c0_i32_1 = arith.constant 0 : i32
    return %c0_i32, %c0_i32_0 : i32, i32
  }
  func.func @transform_3(%arg0: i32) -> (i32, i32, i32) {
    %c0_i32 = arith.constant 0 : i32
    %c0_i32_0 = arith.constant 0 : i32
    %c0_i32_1 = arith.constant 0 : i32
    %c0_i32_2 = arith.constant 0 : i32
    return %c0_i32, %c0_i32_0, %c0_i32_1 : i32, i32, i32
  }
  func.func @transform_4(%arg0: i32) -> (i32, i32) {
    %c0_i32 = arith.constant 0 : i32
    %c0_i32_0 = arith.constant 0 : i32
    %c0_i32_1 = arith.constant 0 : i32
    return %c0_i32, %c0_i32_0 : i32, i32
  }
  func.func @transform_5(%arg0: i32) -> (i32, i32, i32) {
    %c0_i32 = arith.constant 0 : i32
    %c0_i32_0 = arith.constant 0 : i32
    %c0_i32_1 = arith.constant 0 : i32
    %c0_i32_2 = arith.constant 0 : i32
    return %c0_i32, %c0_i32_0, %c0_i32_1 : i32, i32, i32
  }
  func.func @transform_6(%arg0: i32) -> (i32, i32) {
    %c0_i32 = arith.constant 0 : i32
    %c0_i32_0 = arith.constant 0 : i32
    %c0_i32_1 = arith.constant 0 : i32
    return %c0_i32, %c0_i32_0 : i32, i32
  }
  func.func @transform_7(%arg0: i32) -> (i32, i32, i32) {
    %c0_i32 = arith.constant 0 : i32
    %c0_i32_0 = arith.constant 0 : i32
    %c0_i32_1 = arith.constant 0 : i32
    %c0_i32_2 = arith.constant 0 : i32
    return %c0_i32, %c0_i32_0, %c0_i32_1 : i32, i32, i32
  }
  func.func @transform_8(%arg0: i32) -> (i32, i32) {
    %c0_i32 = arith.constant 0 : i32
    %c0_i32_0 = arith.constant 0 : i32
    %c0_i32_1 = arith.constant 0 : i32
    return %c0_i32, %c0_i32_0 : i32, i32
  }
  func.func @transform_9(%arg0: i32) -> (i32, i32) {
    %c0_i32 = arith.constant 0 : i32
    %c0_i32_0 = arith.constant 0 : i32
    %c0_i32_1 = arith.constant 0 : i32
    return %c0_i32, %c0_i32_0 : i32, i32
  }
  func.func @transform_10(%arg0: i32) -> (i32, i32) {
    %c0_i32 = arith.constant 0 : i32
    %c0_i32_0 = arith.constant 0 : i32
    %c0_i32_1 = arith.constant 0 : i32
    return %c0_i32, %c0_i32_0 : i32, i32
  }
  func.func @transform_11(%arg0: i32) -> (i32, i32) {
    %c0_i32 = arith.constant 0 : i32
    %c0_i32_0 = arith.constant 0 : i32
    %c0_i32_1 = arith.constant 0 : i32
    return %c0_i32, %c0_i32_0 : i32, i32
  }
  func.func @transform_12(%arg0: i32) -> (i32, i32) {
    %c0_i32 = arith.constant 0 : i32
    %c0_i32_0 = arith.constant 0 : i32
    %c0_i32_1 = arith.constant 0 : i32
    return %c0_i32, %c0_i32_0 : i32, i32
  }
  func.func @transform_13(%arg0: i32) -> (i32, i32, i32) {
    %c0_i32 = arith.constant 0 : i32
    %c0_i32_0 = arith.constant 0 : i32
    %c0_i32_1 = arith.constant 0 : i32
    return %arg0, %c0_i32, %c0_i32_0 : i32, i32, i32
  }
}

</mosaic_0001>

<llo_original>
// kernel: tpu_custom_call.1
$region0: #{tpu_custom_call.1}
  #allocation0 [shape = 'u32[]', space=smem, size = 0x4, offset = 0x4, fixed_abs, tag = 'smem constant byte address 0x4 - core index']
  #allocation1 [shape = 'u32[72,128]{1,0:T(1,128)}', space=vmem, size = 0x9000, scoped, tag = 'internal scratch']
  %s0 = inlined_call_operand.vmem [shape: f32[1,8,256], index: 0, kind: input, shape index: {}]
  %s1 = inlined_call_operand.vmem [shape: f32[48,8], index: 1, kind: input, shape index: {}]
  %s2 = inlined_call_operand.vmem [shape: f32[48,1], index: 2, kind: input, shape index: {}]
  %s3 = inlined_call_operand.hbm [shape: f32[9,8,256], index: 3, kind: input, shape index: {}]
  %s4 = inlined_call_operand.vmem [shape: f32[8,1], index: 4, kind: input, shape index: {}]
  %s5 = inlined_call_operand.hbm [shape: f32[25,8,256], index: 5, kind: input, shape index: {}]
  %s6 = inlined_call_operand.vmem [shape: f32[8,1], index: 6, kind: input, shape index: {}]
  %s7 = inlined_call_operand.hbm [shape: f32[49,8,256], index: 7, kind: input, shape index: {}]
  %s8 = inlined_call_operand.vmem [shape: f32[8,1], index: 8, kind: input, shape index: {}]
  %s9 = inlined_call_operand.vmem [shape: f32[8,8], index: 9, kind: input, shape index: {}]
  %s10 = inlined_call_operand.vmem [shape: f32[8,1], index: 10, kind: input, shape index: {}]
  %s11 = inlined_call_operand.vmem [shape: f32[16,8], index: 11, kind: input, shape index: {}]
  %s12 = inlined_call_operand.vmem [shape: f32[16,1], index: 12, kind: input, shape index: {}]
  %s13 = inlined_call_operand.hbm [shape: f32[1,16,256], index: 13, kind: output, shape index: {}]
  %s14 = sld [smem:[#allocation0]]
  $region74: #{tpu_custom_call.1} parent=0
    _
  %s16 = ssub.s32 1, %s14
  %s17 = scalar_select 0, %s16, %s14
  $region1: #{tpu_custom_call.1} parent=0
    #allocation2 [shape = 'u8[73728]{0}', space=vmem, size = 0x12000, scoped, tag = 'input window, operand 3, single buffered']
    #allocation3 [shape = 's32[1]{0}', space=sflag, size = 0x4, scoped, tag = 'scoped memory for tpu_custom_call.1']
    #allocation4 [shape = 's32[1]{0}', space=sflag, size = 0x4, scoped, tag = 'scoped memory for tpu_custom_call.1']
    #allocation5 [shape = 'u8[204800]{0}', space=vmem, size = 0x32000, scoped, tag = 'input window, operand 5, single buffered']
    #allocation6 [shape = 's32[1]{0}', space=sflag, size = 0x4, scoped, tag = 'scoped memory for tpu_custom_call.1']
    #allocation7 [shape = 'u8[401408]{0}', space=vmem, size = 0x62000, scoped, tag = 'input window, operand 7, single buffered']
    #allocation8 [shape = 'u8[16384]{0}', space=vmem, size = 0x4000, scoped, tag = 'output window, operand 0, single buffered']
    %18 = vsyncpa [#allocation3], 0
    %19 = vsyncpa [#allocation6], 0
    %20 = vsyncpa [#allocation4], 0
    // Predicated region
    $region2: #{tpu_custom_call.1} parent=1 // pred_check
      _
    $region3: #{tpu_custom_call.1} parent=1 // pred_check_branch
      %22 = sbr.rel (0) target = $region5
    $region4: #{tpu_custom_call.1} parent=1 // pred_region
      _
    $region5: #{tpu_custom_call.1} parent=1 // pred_fallthru
      _
    // Predicated region
    $region6: #{tpu_custom_call.1} parent=1 // pred_check
      _
    $region7: #{tpu_custom_call.1} parent=1 // pred_check_branch
      %24 = sbr.rel (0) target = $region9
    $region8: #{tpu_custom_call.1} parent=1 // pred_region
      _
    $region9: #{tpu_custom_call.1} parent=1 // pred_fallthru
      _
    // Predicated region
    $region10: #{tpu_custom_call.1} parent=1 // pred_check
      _
    $region11: #{tpu_custom_call.1} parent=1 // pred_check_branch
      %26 = sbr.rel (0) target = $region13
    $region12: #{tpu_custom_call.1} parent=1 // pred_region
      _
    $region13: #{tpu_custom_call.1} parent=1 // pred_fallthru
      _
    // Predicated region
    $region14: #{tpu_custom_call.1} parent=1 // pred_check
      _
    $region15: #{tpu_custom_call.1} parent=1 // pred_check_branch
      %28 = sbr.rel (0) target = $region17
    $region16: #{tpu_custom_call.1} parent=1 // pred_region
      %30 = vsyncadd [#allocation3], 0
      %s31 = sshll.u32 %s3, 4
      %s32 = int_to_ptr.hbm [resolvable:$true] %s31
      %s33 = sshll.u32 [#allocation2], 4
      %s34 = int_to_ptr.vmem [resolvable:$true] %s33
      %39 = dma.hbm_to_vmem [thread:$0]  %s32, 2304, %s34, [#allocation3], 256, 256, 16
    $region17: #{tpu_custom_call.1} parent=1 // pred_fallthru
      _
    // Predicated region
    $region18: #{tpu_custom_call.1} parent=1 // pred_check
      _
    $region19: #{tpu_custom_call.1} parent=1 // pred_check_branch
      %41 = sbr.rel (0) target = $region21
    $region20: #{tpu_custom_call.1} parent=1 // pred_region
      _
    $region21: #{tpu_custom_call.1} parent=1 // pred_fallthru
      _
    // Predicated region
    $region22: #{tpu_custom_call.1} parent=1 // pred_check
      _
    $region23: #{tpu_custom_call.1} parent=1 // pred_check_branch
      %43 = sbr.rel (0) target = $region25
    $region24: #{tpu_custom_call.1} parent=1 // pred_region
      %45 = vsyncadd [#allocation6], 0
      %s46 = sshll.u32 %s5, 4
      %s47 = int_to_ptr.hbm [resolvable:$true] %s46
      %s48 = sshll.u32 [#allocation5], 4
      %s49 = int_to_ptr.vmem [resolvable:$true] %s48
      %54 = dma.hbm_to_vmem [thread:$0]  %s47, 6400, %s49, [#allocation6], 256, 256, 16
    $region25: #{tpu_custom_call.1} parent=1 // pred_fallthru
      _
    // Predicated region
    $region26: #{tpu_custom_call.1} parent=1 // pred_check
      _
    $region27: #{tpu_custom_call.1} parent=1 // pred_check_branch
      %56 = sbr.rel (0) target = $region29
    $region28: #{tpu_custom_call.1} parent=1 // pred_region
      _
    $region29: #{tpu_custom_call.1} parent=1 // pred_fallthru
      _
    // Predicated region
    $region30: #{tpu_custom_call.1} parent=1 // pred_check
      _
    $region31: #{tpu_custom_call.1} parent=1 // pred_check_branch
      %58 = sbr.rel (0) target = $region33
    $region32: #{tpu_custom_call.1} parent=1 // pred_region
      %60 = vsyncadd [#allocation6], 0
      %s61 = sshll.u32 %s7, 4
      %s62 = int_to_ptr.hbm [resolvable:$true] %s61
      %s63 = sshll.u32 [#allocation7], 4
      %s64 = int_to_ptr.vmem [resolvable:$true] %s63
      %69 = dma.hbm_to_vmem [thread:$0]  %s62, 12544, %s64, [#allocation6], 256, 256, 16
    $region33: #{tpu_custom_call.1} parent=1 // pred_fallthru
      _
    // Predicated region
    $region34: #{tpu_custom_call.1} parent=1 // pred_check
      _
    $region35: #{tpu_custom_call.1} parent=1 // pred_check_branch
      %71 = sbr.rel (0) target = $region37
    $region36: #{tpu_custom_call.1} parent=1 // pred_region
      _
    $region37: #{tpu_custom_call.1} parent=1 // pred_fallthru
      _
    // Predicated region
    $region38: #{tpu_custom_call.1} parent=1 // pred_check
      _
    $region39: #{tpu_custom_call.1} parent=1 // pred_check_branch
      %73 = sbr.rel (0) target = $region41
    $region40: #{tpu_custom_call.1} parent=1 // pred_region
      _
    $region41: #{tpu_custom_call.1} parent=1 // pred_fallthru
      _
    // Predicated region
    $region42: #{tpu_custom_call.1} parent=1 // pred_check
      _
    $region43: #{tpu_custom_call.1} parent=1 // pred_check_branch
      %75 = sbr.rel (0) target = $region45
    $region44: #{tpu_custom_call.1} parent=1 // pred_region
      _
    $region45: #{tpu_custom_call.1} parent=1 // pred_fallthru
      _
    // Predicated region
    $region46: #{tpu_custom_call.1} parent=1 // pred_check
      _
    $region47: #{tpu_custom_call.1} parent=1 // pred_check_branch
      %77 = sbr.rel (0) target = $region49
    $region48: #{tpu_custom_call.1} parent=1 // pred_region
      _
    $region49: #{tpu_custom_call.1} parent=1 // pred_fallthru
      _
    // Predicated region
    $region50: #{tpu_custom_call.1} parent=1 // pred_check
      _
    $region51: #{tpu_custom_call.1} parent=1 // pred_check_branch
      %79 = sbr.rel (0) target = $region53
    $region52: #{tpu_custom_call.1} parent=1 // pred_region
      _
    $region53: #{tpu_custom_call.1} parent=1 // pred_fallthru
      _
    // Predicated region
    $region54: #{tpu_custom_call.1} parent=1 // pred_check
      _
    $region55: #{tpu_custom_call.1} parent=1 // pred_check_branch
      %81 = sbr.rel (0) target = $region57
    $region56: #{tpu_custom_call.1} parent=1 // pred_region
      %83 = dma.done [#allocation3], 2304
    $region57: #{tpu_custom_call.1} parent=1 // pred_fallthru
      _
    // Predicated region
    $region58: #{tpu_custom_call.1} parent=1 // pred_check
      _
    $region59: #{tpu_custom_call.1} parent=1 // pred_check_branch
      %85 = sbr.rel (0) target = $region61
    $region60: #{tpu_custom_call.1} parent=1 // pred_region
      %87 = dma.done [#allocation6], 6400
    $region61: #{tpu_custom_call.1} parent=1 // pred_fallthru
      _
    // Predicated region
    $region62: #{tpu_custom_call.1} parent=1 // pred_check
      _
    $region63: #{tpu_custom_call.1} parent=1 // pred_check_branch
      %89 = sbr.rel (0) target = $region65
    $region64: #{tpu_custom_call.1} parent=1 // pred_region
      %91 = dma.done [#allocation6], 12544
    $region65: #{tpu_custom_call.1} parent=1 // pred_fallthru
      _
    %v92 = vld [vmem:[%s0] sm:$0xff]
    %v93 = vld [vmem:[%s0 + $0x8] sm:$0xff]
    %v94 = vld [vmem:[%s1] sm:$0xff]
    %v95 = vld [vmem:[%s1 + $0x8] sm:$0xff]
    %v96 = vld [vmem:[%s1 + $0x10] sm:$0xff]
    %v97 = vld [vmem:[%s1 + $0x18] sm:$0xff]
    %v98 = vld [vmem:[%s1 + $0x20] sm:$0xff]
    %v99 = vld [vmem:[%s1 + $0x28] sm:$0xff]
    %v100 = vld [vmem:[%s2] sm:$0xff]
    %v101 = vld [vmem:[%s2 + $0x8] sm:$0xff]
    %v102 = vld [vmem:[%s2 + $0x10] sm:$0xff]
    %v103 = vld [vmem:[%s2 + $0x18] sm:$0xff]
    %v104 = vld [vmem:[%s2 + $0x20] sm:$0xff]
    %v105 = vld [vmem:[%s2 + $0x28] sm:$0xff]
    %107 = vset.pattern.permute.xlu0 0
    %108 = vperm.xlu0 %107, %v100
    %v109 = vpop.permute.xlu0 %108
    %112 = vset.pattern.permute.xlu0 0
    %113 = vperm.xlu0 %112, %v101
    %v114 = vpop.permute.xlu0 %113
    %117 = vset.pattern.permute.xlu0 0
    %118 = vperm.xlu0 %117, %v102
    %v119 = vpop.permute.xlu0 %118
    %122 = vset.pattern.permute.xlu0 0
    %123 = vperm.xlu0 %122, %v103
    %v124 = vpop.permute.xlu0 %123
    %127 = vset.pattern.permute.xlu0 0
    %128 = vperm.xlu0 %127, %v104
    %v129 = vpop.permute.xlu0 %128
    %132 = vset.pattern.permute.xlu0 0
    %133 = vperm.xlu0 %132, %v105
    %v134 = vpop.permute.xlu0 %133
    %vm136 = vcmask 64512
    %v138 = vsel %vm136, %v94, 0
    %v141 = vsel %vm136, %v95, 0
    %v144 = vsel %vm136, %v96, 0
    %v147 = vsel %vm136, %v97, 0
    %v150 = vsel %vm136, %v98, 0
    %v153 = vsel %vm136, %v99, 0
    %155 = vmatpush.msra.mxu0 0.0
    %156 = vmatpush.msra.mxu0 0.0
    %157 = vmatpush.msra.mxu0 0.0
    %158 = vmatpush.msra.mxu0 0.0
    %159 = vmatpush.msra.mxu0 0.0
    %160 = vmatpush.msra.mxu0 0.0
    %161 = vmatpush.msra.mxu0 0.0
    %162 = vmatpush.msra.mxu0 0.0
    %163 = vmatpush.msra.mxu0 0.0
    %164 = vmatpush.msra.mxu0 0.0
    %165 = vmatpush.msra.mxu0 0.0
    %166 = vmatpush.msra.mxu0 0.0
    %167 = vmatpush.msra.mxu0 0.0
    %168 = vmatpush.msra.mxu0 0.0
    %169 = vmatpush.msra.mxu0 0.0
    %170 = vmatpush.msra.mxu0 %v92
    %171 = vmatmul.f32.gmra.mxu0 %v138
    %v172 = vpop.f32.mrf.mxu0
    %v173 = vadd.f32 %v109, %v172
    %174 = vmatmul.f32.gmra.mxu0 %v141
    %v175 = vpop.f32.mrf.mxu0
    %v176 = vadd.f32 %v114, %v175
    %177 = vmatmul.f32.gmra.mxu0 %v144
    %v178 = vpop.f32.mrf.mxu0
    %v179 = vadd.f32 %v119, %v178
    %180 = vmatmul.f32.gmra.mxu0 %v147
    %v181 = vpop.f32.mrf.mxu0
    %v182 = vadd.f32 %v124, %v181
    %183 = vmatmul.f32.gmra.mxu0 %v150
    %v184 = vpop.f32.mrf.mxu0
    %v185 = vadd.f32 %v129, %v184
    %186 = vmatmul.f32.gmra.mxu0 %v153
    %v187 = vpop.f32.mrf.mxu0
    %v188 = vadd.f32 %v134, %v187
    %189 = vdwg.mxu0
    %190 = vmatpush.msra.mxu0 0.0
    %191 = vmatpush.msra.mxu0 0.0
    %192 = vmatpush.msra.mxu0 0.0
    %193 = vmatpush.msra.mxu0 0.0
    %194 = vmatpush.msra.mxu0 0.0
    %195 = vmatpush.msra.mxu0 0.0
    %196 = vmatpush.msra.mxu0 0.0
    %197 = vmatpush.msra.mxu0 0.0
    %198 = vmatpush.msra.mxu0 0.0
    %199 = vmatpush.msra.mxu0 0.0
    %200 = vmatpush.msra.mxu0 0.0
    %201 = vmatpush.msra.mxu0 0.0
    %202 = vmatpush.msra.mxu0 0.0
    %203 = vmatpush.msra.mxu0 0.0
    %204 = vmatpush.msra.mxu0 0.0
    %205 = vmatpush.msra.mxu0 %v93
    %206 = vmatmul.f32.gmra.mxu0 %v138
    %v207 = vpop.f32.mrf.mxu0
    %v208 = vadd.f32 %v109, %v207
    %209 = vmatmul.f32.gmra.mxu0 %v141
    %v210 = vpop.f32.mrf.mxu0
    %v211 = vadd.f32 %v114, %v210
    %212 = vmatmul.f32.gmra.mxu0 %v144
    %v213 = vpop.f32.mrf.mxu0
    %v214 = vadd.f32 %v119, %v213
    %215 = vmatmul.f32.gmra.mxu0 %v147
    %v216 = vpop.f32.mrf.mxu0
    %v217 = vadd.f32 %v124, %v216
    %218 = vmatmul.f32.gmra.mxu0 %v150
    %v219 = vpop.f32.mrf.mxu0
    %v220 = vadd.f32 %v129, %v219
    %221 = vmatmul.f32.gmra.mxu0 %v153
    %v222 = vpop.f32.mrf.mxu0
    %v223 = vadd.f32 %v134, %v222
    %224 = vdwg.mxu0
    %225 = vrot.lane.b32.xlu0 %v176, 17
    %v226 = vpop.permute.xlu0 %225
    %227 = vrot.lane.b32.xlu0 %v211, 17
    %v228 = vpop.permute.xlu0 %227
    %v229 = vlaneseq
    %v230 = vand.u32 %v229, 127
    %vm231 = vcmp.lt.s32.totalorder %v230, 17
    %v232 = vsel %vm231, %v226, %v228
    %v233 = vsel %vm231, %v228, %v226
    %v234 = vld [vmem:[#allocation2] sm:$0xff]
    %v235 = vld [vmem:[#allocation2 + $0x8] sm:$0xff]
    %v236 = vmul.f32 %v233, %v234
    %v237 = vmul.f32 %v232, %v235
    %238 = vrot.lane.b32.xlu0 %v176, 16
    %v239 = vpop.permute.xlu0 %238
    %240 = vrot.lane.b32.xlu0 %v211, 16
    %v241 = vpop.permute.xlu0 %240
    %vm242 = vcmp.lt.s32.totalorder %v230, 16
    %v243 = vsel %vm242, %v239, %v241
    %v244 = vsel %vm242, %v241, %v239
    %s245 = scalar_lea.vmem [#allocation2], 16
    %v246 = vld [vmem:[%s245] sm:$0xff]
    %v247 = vld [vmem:[%s245 + $0x8] sm:$0xff]
    %v248 = vmul.f32 %v244, %v246
    %v249 = vmul.f32 %v243, %v247
    %250 = vrot.lane.b32.xlu0 %v176, 15
    %v251 = vpop.permute.xlu0 %250
    %252 = vrot.lane.b32.xlu0 %v211, 15
    %v253 = vpop.permute.xlu0 %252
    %vm254 = vcmp.lt.s32.totalorder %v230, 15
    %v255 = vsel %vm254, %v251, %v253
    %v256 = vsel %vm254, %v253, %v251
    %s257 = scalar_lea.vmem [#allocation2], 32
    %v258 = vld [vmem:[%s257] sm:$0xff]
    %v259 = vld [vmem:[%s257 + $0x8] sm:$0xff]
    %v260 = vmul.f32 %v256, %v258
    %v261 = vmul.f32 %v255, %v259
    %262 = vrot.lane.b32.xlu0 %v176, 1
    %v263 = vpop.permute.xlu0 %262
    %264 = vrot.lane.b32.xlu0 %v211, 1
    %v265 = vpop.permute.xlu0 %264
    %vm266 = vcmp.lt.s32.totalorder %v230, 1
    %v267 = vsel %vm266, %v263, %v265
    %v268 = vsel %vm266, %v265, %v263
    %s269 = scalar_lea.vmem [#allocation2], 48
    %v270 = vld [vmem:[%s269] sm:$0xff]
    %v271 = vld [vmem:[%s269 + $0x8] sm:$0xff]
    %v272 = vmul.f32 %v268, %v270
    %v273 = vmul.f32 %v267, %v271
    %s274 = scalar_lea.vmem [#allocation2], 64
    %v275 = vld [vmem:[%s274] sm:$0xff]
    %v276 = vld [vmem:[%s274 + $0x8] sm:$0xff]
    %v277 = vmul.f32 %v176, %v275
    %v278 = vmul.f32 %v211, %v276
    %v279 = vadd.f32 %v236, %v277
    %v280 = vadd.f32 %v237, %v278
    %281 = vrot.lane.b32.xlu0 %v176, 127
    %v282 = vpop.permute.xlu0 %281
    %283 = vrot.lane.b32.xlu0 %v211, 127
    %v284 = vpop.permute.xlu0 %283
    %vm285 = vcmp.lt.s32.totalorder %v230, 127
    %v286 = vsel %vm285, %v282, %v284
    %v287 = vsel %vm285, %v284, %v282
    %s288 = scalar_lea.vmem [#allocation2], 80
    %v289 = vld [vmem:[%s288] sm:$0xff]
    %v290 = vld [vmem:[%s288 + $0x8] sm:$0xff]
    %v291 = vmul.f32 %v286, %v289
    %v292 = vmul.f32 %v287, %v290
    %v293 = vadd.f32 %v248, %v291
    %v294 = vadd.f32 %v249, %v292
    %295 = vrot.lane.b32.xlu0 %v176, 113
    %v296 = vpop.permute.xlu0 %295
    %297 = vrot.lane.b32.xlu0 %v211, 113
    %v298 = vpop.permute.xlu0 %297
    %vm299 = vcmp.lt.s32.totalorder %v230, 113
    %v300 = vsel %vm299, %v296, %v298
    %v301 = vsel %vm299, %v298, %v296
    %s302 = scalar_lea.vmem [#allocation2], 96
    %v303 = vld [vmem:[%s302] sm:$0xff]
    %v304 = vld [vmem:[%s302 + $0x8] sm:$0xff]
    %v305 = vmul.f32 %v300, %v303
    %v306 = vmul.f32 %v301, %v304
    %v307 = vadd.f32 %v260, %v305
    %v308 = vadd.f32 %v261, %v306
    %309 = vrot.lane.b32.xlu0 %v176, 112
    %v310 = vpop.permute.xlu0 %309
    %311 = vrot.lane.b32.xlu0 %v211, 112
    %v312 = vpop.permute.xlu0 %311
    %vm313 = vcmp.lt.s32.totalorder %v230, 112
    %v314 = vsel %vm313, %v310, %v312
    %v315 = vsel %vm313, %v312, %v310
    %s316 = scalar_lea.vmem [#allocation2], 112
    %v317 = vld [vmem:[%s316] sm:$0xff]
    %v318 = vld [vmem:[%s316 + $0x8] sm:$0xff]
    %v319 = vmul.f32 %v314, %v317
    %v320 = vmul.f32 %v315, %v318
    %v321 = vadd.f32 %v272, %v319
    %v322 = vadd.f32 %v273, %v320
    %323 = vrot.lane.b32.xlu0 %v176, 111
    %v324 = vpop.permute.xlu0 %323
    %325 = vrot.lane.b32.xlu0 %v211, 111
    %v326 = vpop.permute.xlu0 %325
    %vm327 = vcmp.lt.s32.totalorder %v230, 111
    %v328 = vsel %vm327, %v324, %v326
    %v329 = vsel %vm327, %v326, %v324
    %s330 = scalar_lea.vmem [#allocation2], 128
    %v331 = vld [vmem:[%s330] sm:$0xff]
    %v332 = vld [vmem:[%s330 + $0x8] sm:$0xff]
    %v333 = vmul.f32 %v328, %v331
    %v334 = vmul.f32 %v329, %v332
    %v335 = vadd.f32 %v279, %v333
    %v336 = vadd.f32 %v280, %v334
    %v337 = vadd.f32 %v335, %v293
    %v338 = vadd.f32 %v336, %v294
    %v339 = vadd.f32 %v307, %v321
    %v340 = vadd.f32 %v308, %v322
    %v341 = vadd.f32 %v337, %v339
    %v342 = vadd.f32 %v338, %v340
    %v343 = vld [vmem:[%s4] sm:$0xff]
    %345 = vset.pattern.permute.xlu0 0
    %346 = vperm.xlu0 %345, %v343
    %v347 = vpop.permute.xlu0 %346
    %v349 = vadd.f32 %v341, %v347
    %v350 = vadd.f32 %v342, %v347
    %v351 = vsub.f32 0.0, %v349
    %v352 = vsub.f32 0.0, %v350
    %v353 = vmul.f32 %v351, 1.442695
    %v354 = vpow.pop %v353
    %v355 = vmul.f32 %v352, 1.442695
    %v356 = vpow.pop %v355
    %v357 = vadd.f32 %v354, 1.0
    %v358 = vadd.f32 %v356, 1.0
    %v359 = vrcp.pop %v357
    %v360 = vmul.f32 %v357, %v359
    %v361 = vsub.f32 1.0, %v360
    %v362 = vmul.f32 %v359, %v361
    %v363 = vadd.f32 %v359, %v362
    %vm364 = vweird.f32 %v357
    %vm365 = vweird.f32 %v359
    %vm366 = vmor %vm364, %vm365
    %v367 = vsel %vm366, %v359, %v363
    %v368 = vand.u32 2147483647, %v357
    %vm369 = vcmp.eq.f32.partialorder %v368, 8.507059e+37
    %v370 = vand.u32 %v357, 2147483648
    %v371 = vor.u32 1.1754944e-38, %v370
    %v372 = vsel %vm369, %v371, %v367
    %v373 = vmul.f32 1.0, %v372
    %v374 = vrcp.pop %v358
    %v375 = vmul.f32 %v358, %v374
    %v376 = vsub.f32 1.0, %v375
    %v377 = vmul.f32 %v374, %v376
    %v378 = vadd.f32 %v374, %v377
    %vm379 = vweird.f32 %v358
    %vm380 = vweird.f32 %v374
    %vm381 = vmor %vm379, %vm380
    %v382 = vsel %vm381, %v374, %v378
    %v383 = vand.u32 2147483647, %v358
    %vm384 = vcmp.eq.f32.partialorder %v383, 8.507059e+37
    %v385 = vand.u32 %v358, 2147483648
    %v386 = vor.u32 1.1754944e-38, %v385
    %v387 = vsel %vm384, %v386, %v382
    %v388 = vmul.f32 1.0, %v387
    %v389 = vmul.f32 %v349, %v373
    %v390 = vmul.f32 %v350, %v388
    %v391 = vmul.f32 %v389, %v179
    %v392 = vmul.f32 %v390, %v214
    %393 = vrot.lane.b32.xlu0 %v389, 34
    %v394 = vpop.permute.xlu0 %393
    %395 = vrot.lane.b32.xlu0 %v390, 34
    %v396 = vpop.permute.xlu0 %395
    %vm397 = vcmp.lt.s32.totalorder %v230, 34
    %v398 = vsel %vm397, %v394, %v396
    %v399 = vsel %vm397, %v396, %v394
    %v400 = vld [vmem:[#allocation5] sm:$0xff]
    %v401 = vld [vmem:[#allocation5 + $0x8] sm:$0xff]
    %v402 = vmul.f32 %v399, %v400
    %v403 = vmul.f32 %v398, %v401
    %404 = vrot.lane.b32.xlu0 %v389, 33
    %v405 = vpop.permute.xlu0 %404
    %406 = vrot.lane.b32.xlu0 %v390, 33
    %v407 = vpop.permute.xlu0 %406
    %vm408 = vcmp.lt.s32.totalorder %v230, 33
    %v409 = vsel %vm408, %v405, %v407
    %v410 = vsel %vm408, %v407, %v405
    %s411 = scalar_lea.vmem [#allocation5], 16
    %v412 = vld [vmem:[%s411] sm:$0xff]
    %v413 = vld [vmem:[%s411 + $0x8] sm:$0xff]
    %v414 = vmul.f32 %v410, %v412
    %v415 = vmul.f32 %v409, %v413
    %416 = vrot.lane.b32.xlu0 %v389, 32
    %v417 = vpop.permute.xlu0 %416
    %418 = vrot.lane.b32.xlu0 %v390, 32
    %v419 = vpop.permute.xlu0 %418
    %vm420 = vcmp.lt.s32.totalorder %v230, 32
    %v421 = vsel %vm420, %v417, %v419
    %v422 = vsel %vm420, %v419, %v417
    %s423 = scalar_lea.vmem [#allocation5], 32
    %v424 = vld [vmem:[%s423] sm:$0xff]
    %v425 = vld [vmem:[%s423 + $0x8] sm:$0xff]
    %v426 = vmul.f32 %v422, %v424
    %v427 = vmul.f32 %v421, %v425
    %428 = vrot.lane.b32.xlu0 %v389, 31
    %v429 = vpop.permute.xlu0 %428
    %430 = vrot.lane.b32.xlu0 %v390, 31
    %v431 = vpop.permute.xlu0 %430
    %vm432 = vcmp.lt.s32.totalorder %v230, 31
    %v433 = vsel %vm432, %v429, %v431
    %v434 = vsel %vm432, %v431, %v429
    %s435 = scalar_lea.vmem [#allocation5], 48
    %v436 = vld [vmem:[%s435] sm:$0xff]
    %v437 = vld [vmem:[%s435 + $0x8] sm:$0xff]
    %v438 = vmul.f32 %v434, %v436
    %v439 = vmul.f32 %v433, %v437
    %440 = vrot.lane.b32.xlu0 %v389, 30
    %v441 = vpop.permute.xlu0 %440
    %442 = vrot.lane.b32.xlu0 %v390, 30
    %v443 = vpop.permute.xlu0 %442
    %vm444 = vcmp.lt.s32.totalorder %v230, 30
    %v445 = vsel %vm444, %v441, %v443
    %v446 = vsel %vm444, %v443, %v441
    %s447 = scalar_lea.vmem [#allocation5], 64
    %v448 = vld [vmem:[%s447] sm:$0xff]
    %v449 = vld [vmem:[%s447 + $0x8] sm:$0xff]
    %v450 = vmul.f32 %v446, %v448
    %v451 = vmul.f32 %v445, %v449
    %v452 = vadd.f32 %v402, %v450
    %v453 = vadd.f32 %v403, %v451
    %454 = vrot.lane.b32.xlu0 %v389, 18
    %v455 = vpop.permute.xlu0 %454
    %456 = vrot.lane.b32.xlu0 %v390, 18
    %v457 = vpop.permute.xlu0 %456
    %vm458 = vcmp.lt.s32.totalorder %v230, 18
    %v459 = vsel %vm458, %v455, %v457
    %v460 = vsel %vm458, %v457, %v455
    %s461 = scalar_lea.vmem [#allocation5], 80
    %v462 = vld [vmem:[%s461] sm:$0xff]
    %v463 = vld [vmem:[%s461 + $0x8] sm:$0xff]
    %v464 = vmul.f32 %v460, %v462
    %v465 = vmul.f32 %v459, %v463
    %v466 = vadd.f32 %v414, %v464
    %v467 = vadd.f32 %v415, %v465
    %468 = vrot.lane.b32.xlu0 %v389, 17
    %v469 = vpop.permute.xlu0 %468
    %470 = vrot.lane.b32.xlu0 %v390, 17
    %v471 = vpop.permute.xlu0 %470
    %v472 = vsel %vm231, %v469, %v471
    %v473 = vsel %vm231, %v471, %v469
    %s474 = scalar_lea.vmem [#allocation5], 96
    %v475 = vld [vmem:[%s474] sm:$0xff]
    %v476 = vld [vmem:[%s474 + $0x8] sm:$0xff]
    %v477 = vmul.f32 %v473, %v475
    %v478 = vmul.f32 %v472, %v476
    %v479 = vadd.f32 %v426, %v477
    %v480 = vadd.f32 %v427, %v478
    %481 = vrot.lane.b32.xlu0 %v389, 16
    %v482 = vpop.permute.xlu0 %481
    %483 = vrot.lane.b32.xlu0 %v390, 16
    %v484 = vpop.permute.xlu0 %483
    %v485 = vsel %vm242, %v482, %v484
    %v486 = vsel %vm242, %v484, %v482
    %s487 = scalar_lea.vmem [#allocation5], 112
    %v488 = vld [vmem:[%s487] sm:$0xff]
    %v489 = vld [vmem:[%s487 + $0x8] sm:$0xff]
    %v490 = vmul.f32 %v486, %v488
    %v491 = vmul.f32 %v485, %v489
    %v492 = vadd.f32 %v438, %v490
    %v493 = vadd.f32 %v439, %v491
    %494 = vrot.lane.b32.xlu0 %v389, 15
    %v495 = vpop.permute.xlu0 %494
    %496 = vrot.lane.b32.xlu0 %v390, 15
    %v497 = vpop.permute.xlu0 %496
    %v498 = vsel %vm254, %v495, %v497
    %v499 = vsel %vm254, %v497, %v495
    %s500 = scalar_lea.vmem [#allocation5], 128
    %v501 = vld [vmem:[%s500] sm:$0xff]
    %v502 = vld [vmem:[%s500 + $0x8] sm:$0xff]
    %v503 = vmul.f32 %v499, %v501
    %v504 = vmul.f32 %v498, %v502
    %v505 = vadd.f32 %v452, %v503
    %v506 = vadd.f32 %v453, %v504
    %507 = vrot.lane.b32.xlu0 %v389, 14
    %v508 = vpop.permute.xlu0 %507
    %509 = vrot.lane.b32.xlu0 %v390, 14
    %v510 = vpop.permute.xlu0 %509
    %vm511 = vcmp.lt.s32.totalorder %v230, 14
    %v512 = vsel %vm511, %v508, %v510
    %v513 = vsel %vm511, %v510, %v508
    %s514 = scalar_lea.vmem [#allocation5], 144
    %v515 = vld [vmem:[%s514] sm:$0xff]
    %v516 = vld [vmem:[%s514 + $0x8] sm:$0xff]
    %v517 = vmul.f32 %v513, %v515
    %v518 = vmul.f32 %v512, %v516
    %v519 = vadd.f32 %v466, %v517
    %v520 = vadd.f32 %v467, %v518
    %521 = vrot.lane.b32.xlu0 %v389, 2
    %v522 = vpop.permute.xlu0 %521
    %523 = vrot.lane.b32.xlu0 %v390, 2
    %v524 = vpop.permute.xlu0 %523
    %vm525 = vcmp.lt.s32.totalorder %v230, 2
    %v526 = vsel %vm525, %v522, %v524
    %v527 = vsel %vm525, %v524, %v522
    %s528 = scalar_lea.vmem [#allocation5], 160
    %v529 = vld [vmem:[%s528] sm:$0xff]
    %v530 = vld [vmem:[%s528 + $0x8] sm:$0xff]
    %v531 = vmul.f32 %v527, %v529
    %v532 = vmul.f32 %v526, %v530
    %v533 = vadd.f32 %v479, %v531
    %v534 = vadd.f32 %v480, %v532
    %535 = vrot.lane.b32.xlu0 %v389, 1
    %v536 = vpop.permute.xlu0 %535
    %537 = vrot.lane.b32.xlu0 %v390, 1
    %v538 = vpop.permute.xlu0 %537
    %v539 = vsel %vm266, %v536, %v538
    %v540 = vsel %vm266, %v538, %v536
    %s541 = scalar_lea.vmem [#allocation5], 176
    %v542 = vld [vmem:[%s541] sm:$0xff]
    %v543 = vld [vmem:[%s541 + $0x8] sm:$0xff]
    %v544 = vmul.f32 %v540, %v542
    %v545 = vmul.f32 %v539, %v543
    %v546 = vadd.f32 %v492, %v544
    %v547 = vadd.f32 %v493, %v545
    %s548 = scalar_lea.vmem [#allocation5], 192
    %v549 = vld [vmem:[%s548] sm:$0xff]
    %v550 = vld [vmem:[%s548 + $0x8] sm:$0xff]
    %v551 = vmul.f32 %v389, %v549
    %v552 = vmul.f32 %v390, %v550
    %v553 = vadd.f32 %v505, %v551
    %v554 = vadd.f32 %v506, %v552
    %555 = vrot.lane.b32.xlu0 %v389, 127
    %v556 = vpop.permute.xlu0 %555
    %557 = vrot.lane.b32.xlu0 %v390, 127
    %v558 = vpop.permute.xlu0 %557
    %v559 = vsel %vm285, %v556, %v558
    %v560 = vsel %vm285, %v558, %v556
    %s561 = scalar_lea.vmem [#allocation5], 208
    %v562 = vld [vmem:[%s561] sm:$0xff]
    %v563 = vld [vmem:[%s561 + $0x8] sm:$0xff]
    %v564 = vmul.f32 %v559, %v562
    %v565 = vmul.f32 %v560, %v563
    %v566 = vadd.f32 %v519, %v564
    %v567 = vadd.f32 %v520, %v565
    %568 = vrot.lane.b32.xlu0 %v389, 126
    %v569 = vpop.permute.xlu0 %568
    %570 = vrot.lane.b32.xlu0 %v390, 126
    %v571 = vpop.permute.xlu0 %570
    %vm572 = vcmp.lt.s32.totalorder %v230, 126
    %v573 = vsel %vm572, %v569, %v571
    %v574 = vsel %vm572, %v571, %v569
    %s575 = scalar_lea.vmem [#allocation5], 224
    %v576 = vld [vmem:[%s575] sm:$0xff]
    %v577 = vld [vmem:[%s575 + $0x8] sm:$0xff]
    %v578 = vmul.f32 %v573, %v576
    %v579 = vmul.f32 %v574, %v577
    %v580 = vadd.f32 %v533, %v578
    %v581 = vadd.f32 %v534, %v579
    %582 = vrot.lane.b32.xlu0 %v389, 114
    %v583 = vpop.permute.xlu0 %582
    %584 = vrot.lane.b32.xlu0 %v390, 114
    %v585 = vpop.permute.xlu0 %584
    %vm586 = vcmp.lt.s32.totalorder %v230, 114
    %v587 = vsel %vm586, %v583, %v585
    %v588 = vsel %vm586, %v585, %v583
    %s589 = scalar_lea.vmem [#allocation5], 240
    %v590 = vld [vmem:[%s589] sm:$0xff]
    %v591 = vld [vmem:[%s589 + $0x8] sm:$0xff]
    %v592 = vmul.f32 %v587, %v590
    %v593 = vmul.f32 %v588, %v591
    %v594 = vadd.f32 %v546, %v592
    %v595 = vadd.f32 %v547, %v593
    %596 = vrot.lane.b32.xlu0 %v389, 113
    %v597 = vpop.permute.xlu0 %596
    %598 = vrot.lane.b32.xlu0 %v390, 113
    %v599 = vpop.permute.xlu0 %598
    %v600 = vsel %vm299, %v597, %v599
    %v601 = vsel %vm299, %v599, %v597
    %s602 = scalar_lea.vmem [#allocation5], 256
    %v603 = vld [vmem:[%s602] sm:$0xff]
    %v604 = vld [vmem:[%s602 + $0x8] sm:$0xff]
    %v605 = vmul.f32 %v600, %v603
    %v606 = vmul.f32 %v601, %v604
    %v607 = vadd.f32 %v553, %v605
    %v608 = vadd.f32 %v554, %v606
    %609 = vrot.lane.b32.xlu0 %v389, 112
    %v610 = vpop.permute.xlu0 %609
    %611 = vrot.lane.b32.xlu0 %v390, 112
    %v612 = vpop.permute.xlu0 %611
    %v613 = vsel %vm313, %v610, %v612
    %v614 = vsel %vm313, %v612, %v610
    %s615 = scalar_lea.vmem [#allocation5], 272
    %v616 = vld [vmem:[%s615] sm:$0xff]
    %v617 = vld [vmem:[%s615 + $0x8] sm:$0xff]
    %v618 = vmul.f32 %v613, %v616
    %v619 = vmul.f32 %v614, %v617
    %v620 = vadd.f32 %v566, %v618
    %v621 = vadd.f32 %v567, %v619
    %622 = vrot.lane.b32.xlu0 %v389, 111
    %v623 = vpop.permute.xlu0 %622
    %624 = vrot.lane.b32.xlu0 %v390, 111
    %v625 = vpop.permute.xlu0 %624
    %v626 = vsel %vm327, %v623, %v625
    %v627 = vsel %vm327, %v625, %v623
    %s628 = scalar_lea.vmem [#allocation5], 288
    %v629 = vld [vmem:[%s628] sm:$0xff]
    %v630 = vld [vmem:[%s628 + $0x8] sm:$0xff]
    %v631 = vmul.f32 %v626, %v629
    %v632 = vmul.f32 %v627, %v630
    %v633 = vadd.f32 %v580, %v631
    %v634 = vadd.f32 %v581, %v632
    %635 = vrot.lane.b32.xlu0 %v389, 110
    %v636 = vpop.permute.xlu0 %635
    %637 = vrot.lane.b32.xlu0 %v390, 110
    %v638 = vpop.permute.xlu0 %637
    %vm639 = vcmp.lt.s32.totalorder %v230, 110
    %v640 = vsel %vm639, %v636, %v638
    %v641 = vsel %vm639, %v638, %v636
    %s642 = scalar_lea.vmem [#allocation5], 304
    %v643 = vld [vmem:[%s642] sm:$0xff]
    %v644 = vld [vmem:[%s642 + $0x8] sm:$0xff]
    %v645 = vmul.f32 %v640, %v643
    %v646 = vmul.f32 %v641, %v644
    %v647 = vadd.f32 %v594, %v645
    %v648 = vadd.f32 %v595, %v646
    %649 = vrot.lane.b32.xlu0 %v389, 98
    %v650 = vpop.permute.xlu0 %649
    %651 = vrot.lane.b32.xlu0 %v390, 98
    %v652 = vpop.permute.xlu0 %651
    %vm653 = vcmp.lt.s32.totalorder %v230, 98
    %v654 = vsel %vm653, %v650, %v652
    %v655 = vsel %vm653, %v652, %v650
    %s656 = scalar_lea.vmem [#allocation5], 320
    %v657 = vld [vmem:[%s656] sm:$0xff]
    %v658 = vld [vmem:[%s656 + $0x8] sm:$0xff]
    %v659 = vmul.f32 %v654, %v657
    %v660 = vmul.f32 %v655, %v658
    %v661 = vadd.f32 %v607, %v659
    %v662 = vadd.f32 %v608, %v660
    %663 = vrot.lane.b32.xlu0 %v389, 97
    %v664 = vpop.permute.xlu0 %663
    %665 = vrot.lane.b32.xlu0 %v390, 97
    %v666 = vpop.permute.xlu0 %665
    %vm667 = vcmp.lt.s32.totalorder %v230, 97
    %v668 = vsel %vm667, %v664, %v666
    %v669 = vsel %vm667, %v666, %v664
    %s670 = scalar_lea.vmem [#allocation5], 336
    %v671 = vld [vmem:[%s670] sm:$0xff]
    %v672 = vld [vmem:[%s670 + $0x8] sm:$0xff]
    %v673 = vmul.f32 %v668, %v671
    %v674 = vmul.f32 %v669, %v672
    %v675 = vadd.f32 %v620, %v673
    %v676 = vadd.f32 %v621, %v674
    %677 = vrot.lane.b32.xlu0 %v389, 96
    %v678 = vpop.permute.xlu0 %677
    %679 = vrot.lane.b32.xlu0 %v390, 96
    %v680 = vpop.permute.xlu0 %679
    %vm681 = vcmp.lt.s32.totalorder %v230, 96
    %v682 = vsel %vm681, %v678, %v680
    %v683 = vsel %vm681, %v680, %v678
    %s684 = scalar_lea.vmem [#allocation5], 352
    %v685 = vld [vmem:[%s684] sm:$0xff]
    %v686 = vld [vmem:[%s684 + $0x8] sm:$0xff]
    %v687 = vmul.f32 %v682, %v685
    %v688 = vmul.f32 %v683, %v686
    %v689 = vadd.f32 %v633, %v687
    %v690 = vadd.f32 %v634, %v688
    %691 = vrot.lane.b32.xlu0 %v389, 95
    %v692 = vpop.permute.xlu0 %691
    %693 = vrot.lane.b32.xlu0 %v390, 95
    %v694 = vpop.permute.xlu0 %693
    %vm695 = vcmp.lt.s32.totalorder %v230, 95
    %v696 = vsel %vm695, %v692, %v694
    %v697 = vsel %vm695, %v694, %v692
    %s698 = scalar_lea.vmem [#allocation5], 368
    %v699 = vld [vmem:[%s698] sm:$0xff]
    %v700 = vld [vmem:[%s698 + $0x8] sm:$0xff]
    %v701 = vmul.f32 %v696, %v699
    %v702 = vmul.f32 %v697, %v700
    %v703 = vadd.f32 %v647, %v701
    %v704 = vadd.f32 %v648, %v702
    %705 = vrot.lane.b32.xlu0 %v389, 94
    %v706 = vpop.permute.xlu0 %705
    %707 = vrot.lane.b32.xlu0 %v390, 94
    %v708 = vpop.permute.xlu0 %707
    %vm709 = vcmp.lt.s32.totalorder %v230, 94
    %v710 = vsel %vm709, %v706, %v708
    %v711 = vsel %vm709, %v708, %v706
    %s712 = scalar_lea.vmem [#allocation5], 384
    %v713 = vld [vmem:[%s712] sm:$0xff]
    %v714 = vld [vmem:[%s712 + $0x8] sm:$0xff]
    %v715 = vmul.f32 %v710, %v713
    %v716 = vmul.f32 %v711, %v714
    %v717 = vadd.f32 %v661, %v715
    %v718 = vadd.f32 %v662, %v716
    %v719 = vadd.f32 %v717, %v675
    %v720 = vadd.f32 %v718, %v676
    %v721 = vadd.f32 %v689, %v703
    %v722 = vadd.f32 %v690, %v704
    %v723 = vadd.f32 %v719, %v721
    %v724 = vadd.f32 %v720, %v722
    %v725 = vld [vmem:[%s6] sm:$0xff]
    %727 = vset.pattern.permute.xlu0 0
    %728 = vperm.xlu0 %727, %v725
    %v729 = vpop.permute.xlu0 %728
    %v731 = vadd.f32 %v723, %v729
    %v732 = vadd.f32 %v724, %v729
    %v733 = vsub.f32 0.0, %v731
    %v734 = vsub.f32 0.0, %v732
    %v735 = vmul.f32 %v733, 1.442695
    %v736 = vpow.pop %v735
    %v737 = vmul.f32 %v734, 1.442695
    %v738 = vpow.pop %v737
    %v739 = vadd.f32 %v736, 1.0
    %v740 = vadd.f32 %v738, 1.0
    %v741 = vrcp.pop %v739
    %v742 = vmul.f32 %v739, %v741
    %v743 = vsub.f32 1.0, %v742
    %v744 = vmul.f32 %v741, %v743
    %v745 = vadd.f32 %v741, %v744
    %vm746 = vweird.f32 %v739
    %vm747 = vweird.f32 %v741
    %vm748 = vmor %vm746, %vm747
    %v749 = vsel %vm748, %v741, %v745
    %v750 = vand.u32 2147483647, %v739
    %vm751 = vcmp.eq.f32.partialorder %v750, 8.507059e+37
    %v752 = vand.u32 %v739, 2147483648
    %v753 = vor.u32 1.1754944e-38, %v752
    %v754 = vsel %vm751, %v753, %v749
    %v755 = vmul.f32 1.0, %v754
    %v756 = vrcp.pop %v740
    %v757 = vmul.f32 %v740, %v756
    %v758 = vsub.f32 1.0, %v757
    %v759 = vmul.f32 %v756, %v758
    %v760 = vadd.f32 %v756, %v759
    %vm761 = vweird.f32 %v740
    %vm762 = vweird.f32 %v756
    %vm763 = vmor %vm761, %vm762
    %v764 = vsel %vm763, %v756, %v760
    %v765 = vand.u32 2147483647, %v740
    %vm766 = vcmp.eq.f32.partialorder %v765, 8.507059e+37
    %v767 = vand.u32 %v740, 2147483648
    %v768 = vor.u32 1.1754944e-38, %v767
    %v769 = vsel %vm766, %v768, %v764
    %v770 = vmul.f32 1.0, %v769
    %v771 = vmul.f32 %v731, %v755
    %v772 = vmul.f32 %v732, %v770
    %v773 = vmul.f32 %v771, %v182
    %v774 = vmul.f32 %v772, %v217
    %775 = vrot.lane.b32.xlu0 %v771, 51
    %v776 = vpop.permute.xlu0 %775
    %777 = vrot.lane.b32.xlu0 %v772, 51
    %v778 = vpop.permute.xlu0 %777
    %vm779 = vcmp.lt.s32.totalorder %v230, 51
    %v780 = vsel %vm779, %v776, %v778
    %v781 = vsel %vm779, %v778, %v776
    %v782 = vld [vmem:[#allocation7] sm:$0xff]
    %v783 = vld [vmem:[#allocation7 + $0x8] sm:$0xff]
    %v784 = vmul.f32 %v781, %v782
    %v785 = vmul.f32 %v780, %v783
    %786 = vrot.lane.b32.xlu0 %v771, 50
    %v787 = vpop.permute.xlu0 %786
    %788 = vrot.lane.b32.xlu0 %v772, 50
    %v789 = vpop.permute.xlu0 %788
    %vm790 = vcmp.lt.s32.totalorder %v230, 50
    %v791 = vsel %vm790, %v787, %v789
    %v792 = vsel %vm790, %v789, %v787
    %s793 = scalar_lea.vmem [#allocation7], 16
    %v794 = vld [vmem:[%s793] sm:$0xff]
    %v795 = vld [vmem:[%s793 + $0x8] sm:$0xff]
    %v796 = vmul.f32 %v792, %v794
    %v797 = vmul.f32 %v791, %v795
    %798 = vrot.lane.b32.xlu0 %v771, 49
    %v799 = vpop.permute.xlu0 %798
    %800 = vrot.lane.b32.xlu0 %v772, 49
    %v801 = vpop.permute.xlu0 %800
    %vm802 = vcmp.lt.s32.totalorder %v230, 49
    %v803 = vsel %vm802, %v799, %v801
    %v804 = vsel %vm802, %v801, %v799
    %s805 = scalar_lea.vmem [#allocation7], 32
    %v806 = vld [vmem:[%s805] sm:$0xff]
    %v807 = vld [vmem:[%s805 + $0x8] sm:$0xff]
    %v808 = vmul.f32 %v804, %v806
    %v809 = vmul.f32 %v803, %v807
    %810 = vrot.lane.b32.xlu0 %v771, 48
    %v811 = vpop.permute.xlu0 %810
    %812 = vrot.lane.b32.xlu0 %v772, 48
    %v813 = vpop.permute.xlu0 %812
    %vm814 = vcmp.lt.s32.totalorder %v230, 48
    %v815 = vsel %vm814, %v811, %v813
    %v816 = vsel %vm814, %v813, %v811
    %s817 = scalar_lea.vmem [#allocation7], 48
    %v818 = vld [vmem:[%s817] sm:$0xff]
    %v819 = vld [vmem:[%s817 + $0x8] sm:$0xff]
    %v820 = vmul.f32 %v816, %v818
    %v821 = vmul.f32 %v815, %v819
    %822 = vrot.lane.b32.xlu0 %v771, 47
    %v823 = vpop.permute.xlu0 %822
    %824 = vrot.lane.b32.xlu0 %v772, 47
    %v825 = vpop.permute.xlu0 %824
    %vm826 = vcmp.lt.s32.totalorder %v230, 47
    %v827 = vsel %vm826, %v823, %v825
    %v828 = vsel %vm826, %v825, %v823
    %s829 = scalar_lea.vmem [#allocation7], 64
    %v830 = vld [vmem:[%s829] sm:$0xff]
    %v831 = vld [vmem:[%s829 + $0x8] sm:$0xff]
    %v832 = vmul.f32 %v828, %v830
    %v833 = vmul.f32 %v827, %v831
    %v834 = vadd.f32 %v784, %v832
    %v835 = vadd.f32 %v785, %v833
    %836 = vrot.lane.b32.xlu0 %v771, 46
    %v837 = vpop.permute.xlu0 %836
    %838 = vrot.lane.b32.xlu0 %v772, 46
    %v839 = vpop.permute.xlu0 %838
    %vm840 = vcmp.lt.s32.totalorder %v230, 46
    %v841 = vsel %vm840, %v837, %v839
    %v842 = vsel %vm840, %v839, %v837
    %s843 = scalar_lea.vmem [#allocation7], 80
    %v844 = vld [vmem:[%s843] sm:$0xff]
    %v845 = vld [vmem:[%s843 + $0x8] sm:$0xff]
    %v846 = vmul.f32 %v842, %v844
    %v847 = vmul.f32 %v841, %v845
    %v848 = vadd.f32 %v796, %v846
    %v849 = vadd.f32 %v797, %v847
    %850 = vrot.lane.b32.xlu0 %v771, 45
    %v851 = vpop.permute.xlu0 %850
    %852 = vrot.lane.b32.xlu0 %v772, 45
    %v853 = vpop.permute.xlu0 %852
    %vm854 = vcmp.lt.s32.totalorder %v230, 45
    %v855 = vsel %vm854, %v851, %v853
    %v856 = vsel %vm854, %v853, %v851
    %s857 = scalar_lea.vmem [#allocation7], 96
    %v858 = vld [vmem:[%s857] sm:$0xff]
    %v859 = vld [vmem:[%s857 + $0x8] sm:$0xff]
    %v860 = vmul.f32 %v856, %v858
    %v861 = vmul.f32 %v855, %v859
    %v862 = vadd.f32 %v808, %v860
    %v863 = vadd.f32 %v809, %v861
    %864 = vrot.lane.b32.xlu0 %v771, 35
    %v865 = vpop.permute.xlu0 %864
    %866 = vrot.lane.b32.xlu0 %v772, 35
    %v867 = vpop.permute.xlu0 %866
    %vm868 = vcmp.lt.s32.totalorder %v230, 35
    %v869 = vsel %vm868, %v865, %v867
    %v870 = vsel %vm868, %v867, %v865
    %s871 = scalar_lea.vmem [#allocation7], 112
    %v872 = vld [vmem:[%s871] sm:$0xff]
    %v873 = vld [vmem:[%s871 + $0x8] sm:$0xff]
    %v874 = vmul.f32 %v870, %v872
    %v875 = vmul.f32 %v869, %v873
    %v876 = vadd.f32 %v820, %v874
    %v877 = vadd.f32 %v821, %v875
    %878 = vrot.lane.b32.xlu0 %v771, 34
    %v879 = vpop.permute.xlu0 %878
    %880 = vrot.lane.b32.xlu0 %v772, 34
    %v881 = vpop.permute.xlu0 %880
    %v882 = vsel %vm397, %v879, %v881
    %v883 = vsel %vm397, %v881, %v879
    %s884 = scalar_lea.vmem [#allocation7], 128
    %v885 = vld [vmem:[%s884] sm:$0xff]
    %v886 = vld [vmem:[%s884 + $0x8] sm:$0xff]
    %v887 = vmul.f32 %v883, %v885
    %v888 = vmul.f32 %v882, %v886
    %v889 = vadd.f32 %v834, %v887
    %v890 = vadd.f32 %v835, %v888
    %891 = vrot.lane.b32.xlu0 %v771, 33
    %v892 = vpop.permute.xlu0 %891
    %893 = vrot.lane.b32.xlu0 %v772, 33
    %v894 = vpop.permute.xlu0 %893
    %v895 = vsel %vm408, %v892, %v894
    %v896 = vsel %vm408, %v894, %v892
    %s897 = scalar_lea.vmem [#allocation7], 144
    %v898 = vld [vmem:[%s897] sm:$0xff]
    %v899 = vld [vmem:[%s897 + $0x8] sm:$0xff]
    %v900 = vmul.f32 %v896, %v898
    %v901 = vmul.f32 %v895, %v899
    %v902 = vadd.f32 %v848, %v900
    %v903 = vadd.f32 %v849, %v901
    %904 = vrot.lane.b32.xlu0 %v771, 32
    %v905 = vpop.permute.xlu0 %904
    %906 = vrot.lane.b32.xlu0 %v772, 32
    %v907 = vpop.permute.xlu0 %906
    %v908 = vsel %vm420, %v905, %v907
    %v909 = vsel %vm420, %v907, %v905
    %s910 = scalar_lea.vmem [#allocation7], 160
    %v911 = vld [vmem:[%s910] sm:$0xff]
    %v912 = vld [vmem:[%s910 + $0x8] sm:$0xff]
    %v913 = vmul.f32 %v909, %v911
    %v914 = vmul.f32 %v908, %v912
    %v915 = vadd.f32 %v862, %v913
    %v916 = vadd.f32 %v863, %v914
    %917 = vrot.lane.b32.xlu0 %v771, 31
    %v918 = vpop.permute.xlu0 %917
    %919 = vrot.lane.b32.xlu0 %v772, 31
    %v920 = vpop.permute.xlu0 %919
    %v921 = vsel %vm432, %v918, %v920
    %v922 = vsel %vm432, %v920, %v918
    %s923 = scalar_lea.vmem [#allocation7], 176
    %v924 = vld [vmem:[%s923] sm:$0xff]
    %v925 = vld [vmem:[%s923 + $0x8] sm:$0xff]
    %v926 = vmul.f32 %v922, %v924
    %v927 = vmul.f32 %v921, %v925
    %v928 = vadd.f32 %v876, %v926
    %v929 = vadd.f32 %v877, %v927
    %930 = vrot.lane.b32.xlu0 %v771, 30
    %v931 = vpop.permute.xlu0 %930
    %932 = vrot.lane.b32.xlu0 %v772, 30
    %v933 = vpop.permute.xlu0 %932
    %v934 = vsel %vm444, %v931, %v933
    %v935 = vsel %vm444, %v933, %v931
    %s936 = scalar_lea.vmem [#allocation7], 192
    %v937 = vld [vmem:[%s936] sm:$0xff]
    %v938 = vld [vmem:[%s936 + $0x8] sm:$0xff]
    %v939 = vmul.f32 %v935, %v937
    %v940 = vmul.f32 %v934, %v938
    %v941 = vadd.f32 %v889, %v939
    %v942 = vadd.f32 %v890, %v940
    %943 = vrot.lane.b32.xlu0 %v771, 29
    %v944 = vpop.permute.xlu0 %943
    %945 = vrot.lane.b32.xlu0 %v772, 29
    %v946 = vpop.permute.xlu0 %945
    %vm947 = vcmp.lt.s32.totalorder %v230, 29
    %v948 = vsel %vm947, %v944, %v946
    %v949 = vsel %vm947, %v946, %v944
    %s950 = scalar_lea.vmem [#allocation7], 208
    %v951 = vld [vmem:[%s950] sm:$0xff]
    %v952 = vld [vmem:[%s950 + $0x8] sm:$0xff]
    %v953 = vmul.f32 %v949, %v951
    %v954 = vmul.f32 %v948, %v952
    %v955 = vadd.f32 %v902, %v953
    %v956 = vadd.f32 %v903, %v954
    %957 = vrot.lane.b32.xlu0 %v771, 19
    %v958 = vpop.permute.xlu0 %957
    %959 = vrot.lane.b32.xlu0 %v772, 19
    %v960 = vpop.permute.xlu0 %959
    %vm961 = vcmp.lt.s32.totalorder %v230, 19
    %v962 = vsel %vm961, %v958, %v960
    %v963 = vsel %vm961, %v960, %v958
    %s964 = scalar_lea.vmem [#allocation7], 224
    %v965 = vld [vmem:[%s964] sm:$0xff]
    %v966 = vld [vmem:[%s964 + $0x8] sm:$0xff]
    %v967 = vmul.f32 %v963, %v965
    %v968 = vmul.f32 %v962, %v966
    %v969 = vadd.f32 %v915, %v967
    %v970 = vadd.f32 %v916, %v968
    %971 = vrot.lane.b32.xlu0 %v771, 18
    %v972 = vpop.permute.xlu0 %971
    %973 = vrot.lane.b32.xlu0 %v772, 18
    %v974 = vpop.permute.xlu0 %973
    %v975 = vsel %vm458, %v972, %v974
    %v976 = vsel %vm458, %v974, %v972
    %s977 = scalar_lea.vmem [#allocation7], 240
    %v978 = vld [vmem:[%s977] sm:$0xff]
    %v979 = vld [vmem:[%s977 + $0x8] sm:$0xff]
    %v980 = vmul.f32 %v976, %v978
    %v981 = vmul.f32 %v975, %v979
    %v982 = vadd.f32 %v928, %v980
    %v983 = vadd.f32 %v929, %v981
    %984 = vrot.lane.b32.xlu0 %v771, 17
    %v985 = vpop.permute.xlu0 %984
    %986 = vrot.lane.b32.xlu0 %v772, 17
    %v987 = vpop.permute.xlu0 %986
    %v988 = vsel %vm231, %v985, %v987
    %v989 = vsel %vm231, %v987, %v985
    %s990 = scalar_lea.vmem [#allocation7], 256
    %v991 = vld [vmem:[%s990] sm:$0xff]
    %v992 = vld [vmem:[%s990 + $0x8] sm:$0xff]
    %v993 = vmul.f32 %v989, %v991
    %v994 = vmul.f32 %v988, %v992
    %v995 = vadd.f32 %v941, %v993
    %v996 = vadd.f32 %v942, %v994
    %997 = vrot.lane.b32.xlu0 %v771, 16
    %v998 = vpop.permute.xlu0 %997
    %999 = vrot.lane.b32.xlu0 %v772, 16
    %v1000 = vpop.permute.xlu0 %999
    %v1001 = vsel %vm242, %v998, %v1000
    %v1002 = vsel %vm242, %v1000, %v998
    %s1003 = scalar_lea.vmem [#allocation7], 272
    %v1004 = vld [vmem:[%s1003] sm:$0xff]
    %v1005 = vld [vmem:[%s1003 + $0x8] sm:$0xff]
    %v1006 = vmul.f32 %v1002, %v1004
    %v1007 = vmul.f32 %v1001, %v1005
    %v1008 = vadd.f32 %v955, %v1006
    %v1009 = vadd.f32 %v956, %v1007
    %1010 = vrot.lane.b32.xlu0 %v771, 15
    %v1011 = vpop.permute.xlu0 %1010
    %1012 = vrot.lane.b32.xlu0 %v772, 15
    %v1013 = vpop.permute.xlu0 %1012
    %v1014 = vsel %vm254, %v1011, %v1013
    %v1015 = vsel %vm254, %v1013, %v1011
    %s1016 = scalar_lea.vmem [#allocation7], 288
    %v1017 = vld [vmem:[%s1016] sm:$0xff]
    %v1018 = vld [vmem:[%s1016 + $0x8] sm:$0xff]
    %v1019 = vmul.f32 %v1015, %v1017
    %v1020 = vmul.f32 %v1014, %v1018
    %v1021 = vadd.f32 %v969, %v1019
    %v1022 = vadd.f32 %v970, %v1020
    %1023 = vrot.lane.b32.xlu0 %v771, 14
    %v1024 = vpop.permute.xlu0 %1023
    %1025 = vrot.lane.b32.xlu0 %v772, 14
    %v1026 = vpop.permute.xlu0 %1025
    %v1027 = vsel %vm511, %v1024, %v1026
    %v1028 = vsel %vm511, %v1026, %v1024
    %s1029 = scalar_lea.vmem [#allocation7], 304
    %v1030 = vld [vmem:[%s1029] sm:$0xff]
    %v1031 = vld [vmem:[%s1029 + $0x8] sm:$0xff]
    %v1032 = vmul.f32 %v1028, %v1030
    %v1033 = vmul.f32 %v1027, %v1031
    %v1034 = vadd.f32 %v982, %v1032
    %v1035 = vadd.f32 %v983, %v1033
    %1036 = vrot.lane.b32.xlu0 %v771, 13
    %v1037 = vpop.permute.xlu0 %1036
    %1038 = vrot.lane.b32.xlu0 %v772, 13
    %v1039 = vpop.permute.xlu0 %1038
    %vm1040 = vcmp.lt.s32.totalorder %v230, 13
    %v1041 = vsel %vm1040, %v1037, %v1039
    %v1042 = vsel %vm1040, %v1039, %v1037
    %s1043 = scalar_lea.vmem [#allocation7], 320
    %v1044 = vld [vmem:[%s1043] sm:$0xff]
    %v1045 = vld [vmem:[%s1043 + $0x8] sm:$0xff]
    %v1046 = vmul.f32 %v1042, %v1044
    %v1047 = vmul.f32 %v1041, %v1045
    %v1048 = vadd.f32 %v995, %v1046
    %v1049 = vadd.f32 %v996, %v1047
    %1050 = vrot.lane.b32.xlu0 %v771, 3
    %v1051 = vpop.permute.xlu0 %1050
    %1052 = vrot.lane.b32.xlu0 %v772, 3
    %v1053 = vpop.permute.xlu0 %1052
    %vm1054 = vcmp.lt.s32.totalorder %v230, 3
    %v1055 = vsel %vm1054, %v1051, %v1053
    %v1056 = vsel %vm1054, %v1053, %v1051
    %s1057 = scalar_lea.vmem [#allocation7], 336
    %v1058 = vld [vmem:[%s1057] sm:$0xff]
    %v1059 = vld [vmem:[%s1057 + $0x8] sm:$0xff]
    %v1060 = vmul.f32 %v1056, %v1058
    %v1061 = vmul.f32 %v1055, %v1059
    %v1062 = vadd.f32 %v1008, %v1060
    %v1063 = vadd.f32 %v1009, %v1061
    %1064 = vrot.lane.b32.xlu0 %v771, 2
    %v1065 = vpop.permute.xlu0 %1064
    %1066 = vrot.lane.b32.xlu0 %v772, 2
    %v1067 = vpop.permute.xlu0 %1066
    %v1068 = vsel %vm525, %v1065, %v1067
    %v1069 = vsel %vm525, %v1067, %v1065
    %s1070 = scalar_lea.vmem [#allocation7], 352
    %v1071 = vld [vmem:[%s1070] sm:$0xff]
    %v1072 = vld [vmem:[%s1070 + $0x8] sm:$0xff]
    %v1073 = vmul.f32 %v1069, %v1071
    %v1074 = vmul.f32 %v1068, %v1072
    %v1075 = vadd.f32 %v1021, %v1073
    %v1076 = vadd.f32 %v1022, %v1074
    %1077 = vrot.lane.b32.xlu0 %v771, 1
    %v1078 = vpop.permute.xlu0 %1077
    %1079 = vrot.lane.b32.xlu0 %v772, 1
    %v1080 = vpop.permute.xlu0 %1079
    %v1081 = vsel %vm266, %v1078, %v1080
    %v1082 = vsel %vm266, %v1080, %v1078
    %s1083 = scalar_lea.vmem [#allocation7], 368
    %v1084 = vld [vmem:[%s1083] sm:$0xff]
    %v1085 = vld [vmem:[%s1083 + $0x8] sm:$0xff]
    %v1086 = vmul.f32 %v1082, %v1084
    %v1087 = vmul.f32 %v1081, %v1085
    %v1088 = vadd.f32 %v1034, %v1086
    %v1089 = vadd.f32 %v1035, %v1087
    %s1090 = scalar_lea.vmem [#allocation7], 384
    %v1091 = vld [vmem:[%s1090] sm:$0xff]
    %v1092 = vld [vmem:[%s1090 + $0x8] sm:$0xff]
    %v1093 = vmul.f32 %v771, %v1091
    %v1094 = vmul.f32 %v772, %v1092
    %v1095 = vadd.f32 %v1048, %v1093
    %v1096 = vadd.f32 %v1049, %v1094
    %1097 = vrot.lane.b32.xlu0 %v771, 127
    %v1098 = vpop.permute.xlu0 %1097
    %1099 = vrot.lane.b32.xlu0 %v772, 127
    %v1100 = vpop.permute.xlu0 %1099
    %v1101 = vsel %vm285, %v1098, %v1100
    %v1102 = vsel %vm285, %v1100, %v1098
    %s1103 = scalar_lea.vmem [#allocation7], 400
    %v1104 = vld [vmem:[%s1103] sm:$0xff]
    %v1105 = vld [vmem:[%s1103 + $0x8] sm:$0xff]
    %v1106 = vmul.f32 %v1101, %v1104
    %v1107 = vmul.f32 %v1102, %v1105
    %v1108 = vadd.f32 %v1062, %v1106
    %v1109 = vadd.f32 %v1063, %v1107
    %1110 = vrot.lane.b32.xlu0 %v771, 126
    %v1111 = vpop.permute.xlu0 %1110
    %1112 = vrot.lane.b32.xlu0 %v772, 126
    %v1113 = vpop.permute.xlu0 %1112
    %v1114 = vsel %vm572, %v1111, %v1113
    %v1115 = vsel %vm572, %v1113, %v1111
    %s1116 = scalar_lea.vmem [#allocation7], 416
    %v1117 = vld [vmem:[%s1116] sm:$0xff]
    %v1118 = vld [vmem:[%s1116 + $0x8] sm:$0xff]
    %v1119 = vmul.f32 %v1114, %v1117
    %v1120 = vmul.f32 %v1115, %v1118
    %v1121 = vadd.f32 %v1075, %v1119
    %v1122 = vadd.f32 %v1076, %v1120
    %1123 = vrot.lane.b32.xlu0 %v771, 125
    %v1124 = vpop.permute.xlu0 %1123
    %1125 = vrot.lane.b32.xlu0 %v772, 125
    %v1126 = vpop.permute.xlu0 %1125
    %vm1127 = vcmp.lt.s32.totalorder %v230, 125
    %v1128 = vsel %vm1127, %v1124, %v1126
    %v1129 = vsel %vm1127, %v1126, %v1124
    %s1130 = scalar_lea.vmem [#allocation7], 432
    %v1131 = vld [vmem:[%s1130] sm:$0xff]
    %v1132 = vld [vmem:[%s1130 + $0x8] sm:$0xff]
    %v1133 = vmul.f32 %v1128, %v1131
    %v1134 = vmul.f32 %v1129, %v1132
    %v1135 = vadd.f32 %v1088, %v1133
    %v1136 = vadd.f32 %v1089, %v1134
    %1137 = vrot.lane.b32.xlu0 %v771, 115
    %v1138 = vpop.permute.xlu0 %1137
    %1139 = vrot.lane.b32.xlu0 %v772, 115
    %v1140 = vpop.permute.xlu0 %1139
    %vm1141 = vcmp.lt.s32.totalorder %v230, 115
    %v1142 = vsel %vm1141, %v1138, %v1140
    %v1143 = vsel %vm1141, %v1140, %v1138
    %s1144 = scalar_lea.vmem [#allocation7], 448
    %v1145 = vld [vmem:[%s1144] sm:$0xff]
    %v1146 = vld [vmem:[%s1144 + $0x8] sm:$0xff]
    %v1147 = vmul.f32 %v1142, %v1145
    %v1148 = vmul.f32 %v1143, %v1146
    %v1149 = vadd.f32 %v1095, %v1147
    %v1150 = vadd.f32 %v1096, %v1148
    %1151 = vrot.lane.b32.xlu0 %v771, 114
    %v1152 = vpop.permute.xlu0 %1151
    %1153 = vrot.lane.b32.xlu0 %v772, 114
    %v1154 = vpop.permute.xlu0 %1153
    %v1155 = vsel %vm586, %v1152, %v1154
    %v1156 = vsel %vm586, %v1154, %v1152
    %s1157 = scalar_lea.vmem [#allocation7], 464
    %v1158 = vld [vmem:[%s1157] sm:$0xff]
    %v1159 = vld [vmem:[%s1157 + $0x8] sm:$0xff]
    %v1160 = vmul.f32 %v1155, %v1158
    %v1161 = vmul.f32 %v1156, %v1159
    %v1162 = vadd.f32 %v1108, %v1160
    %v1163 = vadd.f32 %v1109, %v1161
    %1164 = vrot.lane.b32.xlu0 %v771, 113
    %v1165 = vpop.permute.xlu0 %1164
    %1166 = vrot.lane.b32.xlu0 %v772, 113
    %v1167 = vpop.permute.xlu0 %1166
    %v1168 = vsel %vm299, %v1165, %v1167
    %v1169 = vsel %vm299, %v1167, %v1165
    %s1170 = scalar_lea.vmem [#allocation7], 480
    %v1171 = vld [vmem:[%s1170] sm:$0xff]
    %v1172 = vld [vmem:[%s1170 + $0x8] sm:$0xff]
    %v1173 = vmul.f32 %v1168, %v1171
    %v1174 = vmul.f32 %v1169, %v1172
    %v1175 = vadd.f32 %v1121, %v1173
    %v1176 = vadd.f32 %v1122, %v1174
    %1177 = vrot.lane.b32.xlu0 %v771, 112
    %v1178 = vpop.permute.xlu0 %1177
    %1179 = vrot.lane.b32.xlu0 %v772, 112
    %v1180 = vpop.permute.xlu0 %1179
    %v1181 = vsel %vm313, %v1178, %v1180
    %v1182 = vsel %vm313, %v1180, %v1178
    %s1183 = scalar_lea.vmem [#allocation7], 496
    %v1184 = vld [vmem:[%s1183] sm:$0xff]
    %v1185 = vld [vmem:[%s1183 + $0x8] sm:$0xff]
    %v1186 = vmul.f32 %v1181, %v1184
    %v1187 = vmul.f32 %v1182, %v1185
    %v1188 = vadd.f32 %v1135, %v1186
    %v1189 = vadd.f32 %v1136, %v1187
    %1190 = vrot.lane.b32.xlu0 %v771, 111
    %v1191 = vpop.permute.xlu0 %1190
    %1192 = vrot.lane.b32.xlu0 %v772, 111
    %v1193 = vpop.permute.xlu0 %1192
    %v1194 = vsel %vm327, %v1191, %v1193
    %v1195 = vsel %vm327, %v1193, %v1191
    %s1196 = scalar_lea.vmem [#allocation7], 512
    %v1197 = vld [vmem:[%s1196] sm:$0xff]
    %v1198 = vld [vmem:[%s1196 + $0x8] sm:$0xff]
    %v1199 = vmul.f32 %v1194, %v1197
    %v1200 = vmul.f32 %v1195, %v1198
    %v1201 = vadd.f32 %v1149, %v1199
    %v1202 = vadd.f32 %v1150, %v1200
    %1203 = vrot.lane.b32.xlu0 %v771, 110
    %v1204 = vpop.permute.xlu0 %1203
    %1205 = vrot.lane.b32.xlu0 %v772, 110
    %v1206 = vpop.permute.xlu0 %1205
    %v1207 = vsel %vm639, %v1204, %v1206
    %v1208 = vsel %vm639, %v1206, %v1204
    %s1209 = scalar_lea.vmem [#allocation7], 528
    %v1210 = vld [vmem:[%s1209] sm:$0xff]
    %v1211 = vld [vmem:[%s1209 + $0x8] sm:$0xff]
    %v1212 = vmul.f32 %v1207, %v1210
    %v1213 = vmul.f32 %v1208, %v1211
    %v1214 = vadd.f32 %v1162, %v1212
    %v1215 = vadd.f32 %v1163, %v1213
    %1216 = vrot.lane.b32.xlu0 %v771, 109
    %v1217 = vpop.permute.xlu0 %1216
    %1218 = vrot.lane.b32.xlu0 %v772, 109
    %v1219 = vpop.permute.xlu0 %1218
    %vm1220 = vcmp.lt.s32.totalorder %v230, 109
    %v1221 = vsel %vm1220, %v1217, %v1219
    %v1222 = vsel %vm1220, %v1219, %v1217
    %s1223 = scalar_lea.vmem [#allocation7], 544
    %v1224 = vld [vmem:[%s1223] sm:$0xff]
    %v1225 = vld [vmem:[%s1223 + $0x8] sm:$0xff]
    %v1226 = vmul.f32 %v1221, %v1224
    %v1227 = vmul.f32 %v1222, %v1225
    %v1228 = vadd.f32 %v1175, %v1226
    %v1229 = vadd.f32 %v1176, %v1227
    %1230 = vrot.lane.b32.xlu0 %v771, 99
    %v1231 = vpop.permute.xlu0 %1230
    %1232 = vrot.lane.b32.xlu0 %v772, 99
    %v1233 = vpop.permute.xlu0 %1232
    %vm1234 = vcmp.lt.s32.totalorder %v230, 99
    %v1235 = vsel %vm1234, %v1231, %v1233
    %v1236 = vsel %vm1234, %v1233, %v1231
    %s1237 = scalar_lea.vmem [#allocation7], 560
    %v1238 = vld [vmem:[%s1237] sm:$0xff]
    %v1239 = vld [vmem:[%s1237 + $0x8] sm:$0xff]
    %v1240 = vmul.f32 %v1235, %v1238
    %v1241 = vmul.f32 %v1236, %v1239
    %v1242 = vadd.f32 %v1188, %v1240
    %v1243 = vadd.f32 %v1189, %v1241
    %1244 = vrot.lane.b32.xlu0 %v771, 98
    %v1245 = vpop.permute.xlu0 %1244
    %1246 = vrot.lane.b32.xlu0 %v772, 98
    %v1247 = vpop.permute.xlu0 %1246
    %v1248 = vsel %vm653, %v1245, %v1247
    %v1249 = vsel %vm653, %v1247, %v1245
    %s1250 = scalar_lea.vmem [#allocation7], 576
    %v1251 = vld [vmem:[%s1250] sm:$0xff]
    %v1252 = vld [vmem:[%s1250 + $0x8] sm:$0xff]
    %v1253 = vmul.f32 %v1248, %v1251
    %v1254 = vmul.f32 %v1249, %v1252
    %v1255 = vadd.f32 %v1201, %v1253
    %v1256 = vadd.f32 %v1202, %v1254
    %1257 = vrot.lane.b32.xlu0 %v771, 97
    %v1258 = vpop.permute.xlu0 %1257
    %1259 = vrot.lane.b32.xlu0 %v772, 97
    %v1260 = vpop.permute.xlu0 %1259
    %v1261 = vsel %vm667, %v1258, %v1260
    %v1262 = vsel %vm667, %v1260, %v1258
    %s1263 = scalar_lea.vmem [#allocation7], 592
    %v1264 = vld [vmem:[%s1263] sm:$0xff]
    %v1265 = vld [vmem:[%s1263 + $0x8] sm:$0xff]
    %v1266 = vmul.f32 %v1261, %v1264
    %v1267 = vmul.f32 %v1262, %v1265
    %v1268 = vadd.f32 %v1214, %v1266
    %v1269 = vadd.f32 %v1215, %v1267
    %1270 = vrot.lane.b32.xlu0 %v771, 96
    %v1271 = vpop.permute.xlu0 %1270
    %1272 = vrot.lane.b32.xlu0 %v772, 96
    %v1273 = vpop.permute.xlu0 %1272
    %v1274 = vsel %vm681, %v1271, %v1273
    %v1275 = vsel %vm681, %v1273, %v1271
    %s1276 = scalar_lea.vmem [#allocation7], 608
    %v1277 = vld [vmem:[%s1276] sm:$0xff]
    %v1278 = vld [vmem:[%s1276 + $0x8] sm:$0xff]
    %v1279 = vmul.f32 %v1274, %v1277
    %v1280 = vmul.f32 %v1275, %v1278
    %v1281 = vadd.f32 %v1228, %v1279
    %v1282 = vadd.f32 %v1229, %v1280
    %1283 = vrot.lane.b32.xlu0 %v771, 95
    %v1284 = vpop.permute.xlu0 %1283
    %1285 = vrot.lane.b32.xlu0 %v772, 95
    %v1286 = vpop.permute.xlu0 %1285
    %v1287 = vsel %vm695, %v1284, %v1286
    %v1288 = vsel %vm695, %v1286, %v1284
    %s1289 = scalar_lea.vmem [#allocation7], 624
    %v1290 = vld [vmem:[%s1289] sm:$0xff]
    %v1291 = vld [vmem:[%s1289 + $0x8] sm:$0xff]
    %v1292 = vmul.f32 %v1287, %v1290
    %v1293 = vmul.f32 %v1288, %v1291
    %v1294 = vadd.f32 %v1242, %v1292
    %v1295 = vadd.f32 %v1243, %v1293
    %1296 = vrot.lane.b32.xlu0 %v771, 94
    %v1297 = vpop.permute.xlu0 %1296
    %1298 = vrot.lane.b32.xlu0 %v772, 94
    %v1299 = vpop.permute.xlu0 %1298
    %v1300 = vsel %vm709, %v1297, %v1299
    %v1301 = vsel %vm709, %v1299, %v1297
    %s1302 = scalar_lea.vmem [#allocation7], 640
    %v1303 = vld [vmem:[%s1302] sm:$0xff]
    %v1304 = vld [vmem:[%s1302 + $0x8] sm:$0xff]
    %v1305 = vmul.f32 %v1300, %v1303
    %v1306 = vmul.f32 %v1301, %v1304
    %v1307 = vadd.f32 %v1255, %v1305
    %v1308 = vadd.f32 %v1256, %v1306
    %1309 = vrot.lane.b32.xlu0 %v771, 93
    %v1310 = vpop.permute.xlu0 %1309
    %1311 = vrot.lane.b32.xlu0 %v772, 93
    %v1312 = vpop.permute.xlu0 %1311
    %vm1313 = vcmp.lt.s32.totalorder %v230, 93
    %v1314 = vsel %vm1313, %v1310, %v1312
    %v1315 = vsel %vm1313, %v1312, %v1310
    %s1316 = scalar_lea.vmem [#allocation7], 656
    %v1317 = vld [vmem:[%s1316] sm:$0xff]
    %v1318 = vld [vmem:[%s1316 + $0x8] sm:$0xff]
    %v1319 = vmul.f32 %v1314, %v1317
    %v1320 = vmul.f32 %v1315, %v1318
    %v1321 = vadd.f32 %v1268, %v1319
    %v1322 = vadd.f32 %v1269, %v1320
    %1323 = vrot.lane.b32.xlu0 %v771, 83
    %v1324 = vpop.permute.xlu0 %1323
    %1325 = vrot.lane.b32.xlu0 %v772, 83
    %v1326 = vpop.permute.xlu0 %1325
    %vm1327 = vcmp.lt.s32.totalorder %v230, 83
    %v1328 = vsel %vm1327, %v1324, %v1326
    %v1329 = vsel %vm1327, %v1326, %v1324
    %s1330 = scalar_lea.vmem [#allocation7], 672
    %v1331 = vld [vmem:[%s1330] sm:$0xff]
    %v1332 = vld [vmem:[%s1330 + $0x8] sm:$0xff]
    %v1333 = vmul.f32 %v1328, %v1331
    %v1334 = vmul.f32 %v1329, %v1332
    %v1335 = vadd.f32 %v1281, %v1333
    %v1336 = vadd.f32 %v1282, %v1334
    %1337 = vrot.lane.b32.xlu0 %v771, 82
    %v1338 = vpop.permute.xlu0 %1337
    %1339 = vrot.lane.b32.xlu0 %v772, 82
    %v1340 = vpop.permute.xlu0 %1339
    %vm1341 = vcmp.lt.s32.totalorder %v230, 82
    %v1342 = vsel %vm1341, %v1338, %v1340
    %v1343 = vsel %vm1341, %v1340, %v1338
    %s1344 = scalar_lea.vmem [#allocation7], 688
    %v1345 = vld [vmem:[%s1344] sm:$0xff]
    %v1346 = vld [vmem:[%s1344 + $0x8] sm:$0xff]
    %v1347 = vmul.f32 %v1342, %v1345
    %v1348 = vmul.f32 %v1343, %v1346
    %v1349 = vadd.f32 %v1294, %v1347
    %v1350 = vadd.f32 %v1295, %v1348
    %1351 = vrot.lane.b32.xlu0 %v771, 81
    %v1352 = vpop.permute.xlu0 %1351
    %1353 = vrot.lane.b32.xlu0 %v772, 81
    %v1354 = vpop.permute.xlu0 %1353
    %vm1355 = vcmp.lt.s32.totalorder %v230, 81
    %v1356 = vsel %vm1355, %v1352, %v1354
    %v1357 = vsel %vm1355, %v1354, %v1352
    %s1358 = scalar_lea.vmem [#allocation7], 704
    %v1359 = vld [vmem:[%s1358] sm:$0xff]
    %v1360 = vld [vmem:[%s1358 + $0x8] sm:$0xff]
    %v1361 = vmul.f32 %v1356, %v1359
    %v1362 = vmul.f32 %v1357, %v1360
    %v1363 = vadd.f32 %v1307, %v1361
    %v1364 = vadd.f32 %v1308, %v1362
    %1365 = vrot.lane.b32.xlu0 %v771, 80
    %v1366 = vpop.permute.xlu0 %1365
    %1367 = vrot.lane.b32.xlu0 %v772, 80
    %v1368 = vpop.permute.xlu0 %1367
    %vm1369 = vcmp.lt.s32.totalorder %v230, 80
    %v1370 = vsel %vm1369, %v1366, %v1368
    %v1371 = vsel %vm1369, %v1368, %v1366
    %s1372 = scalar_lea.vmem [#allocation7], 720
    %v1373 = vld [vmem:[%s1372] sm:$0xff]
    %v1374 = vld [vmem:[%s1372 + $0x8] sm:$0xff]
    %v1375 = vmul.f32 %v1370, %v1373
    %v1376 = vmul.f32 %v1371, %v1374
    %v1377 = vadd.f32 %v1321, %v1375
    %v1378 = vadd.f32 %v1322, %v1376
    %1379 = vrot.lane.b32.xlu0 %v771, 79
    %v1380 = vpop.permute.xlu0 %1379
    %1381 = vrot.lane.b32.xlu0 %v772, 79
    %v1382 = vpop.permute.xlu0 %1381
    %vm1383 = vcmp.lt.s32.totalorder %v230, 79
    %v1384 = vsel %vm1383, %v1380, %v1382
    %v1385 = vsel %vm1383, %v1382, %v1380
    %s1386 = scalar_lea.vmem [#allocation7], 736
    %v1387 = vld [vmem:[%s1386] sm:$0xff]
    %v1388 = vld [vmem:[%s1386 + $0x8] sm:$0xff]
    %v1389 = vmul.f32 %v1384, %v1387
    %v1390 = vmul.f32 %v1385, %v1388
    %v1391 = vadd.f32 %v1335, %v1389
    %v1392 = vadd.f32 %v1336, %v1390
    %1393 = vrot.lane.b32.xlu0 %v771, 78
    %v1394 = vpop.permute.xlu0 %1393
    %1395 = vrot.lane.b32.xlu0 %v772, 78
    %v1396 = vpop.permute.xlu0 %1395
    %vm1397 = vcmp.lt.s32.totalorder %v230, 78
    %v1398 = vsel %vm1397, %v1394, %v1396
    %v1399 = vsel %vm1397, %v1396, %v1394
    %s1400 = scalar_lea.vmem [#allocation7], 752
    %v1401 = vld [vmem:[%s1400] sm:$0xff]
    %v1402 = vld [vmem:[%s1400 + $0x8] sm:$0xff]
    %v1403 = vmul.f32 %v1398, %v1401
    %v1404 = vmul.f32 %v1399, %v1402
    %v1405 = vadd.f32 %v1349, %v1403
    %v1406 = vadd.f32 %v1350, %v1404
    %1407 = vrot.lane.b32.xlu0 %v771, 77
    %v1408 = vpop.permute.xlu0 %1407
    %1409 = vrot.lane.b32.xlu0 %v772, 77
    %v1410 = vpop.permute.xlu0 %1409
    %vm1411 = vcmp.lt.s32.totalorder %v230, 77
    %v1412 = vsel %vm1411, %v1408, %v1410
    %v1413 = vsel %vm1411, %v1410, %v1408
    %s1414 = scalar_lea.vmem [#allocation7], 768
    %v1415 = vld [vmem:[%s1414] sm:$0xff]
    %v1416 = vld [vmem:[%s1414 + $0x8] sm:$0xff]
    %v1417 = vmul.f32 %v1412, %v1415
    %v1418 = vmul.f32 %v1413, %v1416
    %v1419 = vadd.f32 %v1363, %v1417
    %v1420 = vadd.f32 %v1364, %v1418
    %v1421 = vadd.f32 %v1419, %v1377
    %v1422 = vadd.f32 %v1420, %v1378
    %v1423 = vadd.f32 %v1391, %v1405
    %v1424 = vadd.f32 %v1392, %v1406
    %v1425 = vadd.f32 %v1421, %v1423
    %v1426 = vadd.f32 %v1422, %v1424
    %v1427 = vld [vmem:[%s8] sm:$0xff]
    %1429 = vset.pattern.permute.xlu0 0
    %1430 = vperm.xlu0 %1429, %v1427
    %v1431 = vpop.permute.xlu0 %1430
    %v1433 = vadd.f32 %v1425, %v1431
    %v1434 = vadd.f32 %v1426, %v1431
    %v1435 = vsub.f32 0.0, %v1433
    %v1436 = vsub.f32 0.0, %v1434
    %v1437 = vmul.f32 %v1435, 1.442695
    %v1438 = vpow.pop %v1437
    %v1439 = vmul.f32 %v1436, 1.442695
    %v1440 = vpow.pop %v1439
    %v1441 = vadd.f32 %v1438, 1.0
    %v1442 = vadd.f32 %v1440, 1.0
    %v1443 = vrcp.pop %v1441
    %v1444 = vmul.f32 %v1441, %v1443
    %v1445 = vsub.f32 1.0, %v1444
    %v1446 = vmul.f32 %v1443, %v1445
    %v1447 = vadd.f32 %v1443, %v1446
    %vm1448 = vweird.f32 %v1441
    %vm1449 = vweird.f32 %v1443
    %vm1450 = vmor %vm1448, %vm1449
    %v1451 = vsel %vm1450, %v1443, %v1447
    %v1452 = vand.u32 2147483647, %v1441
    %vm1453 = vcmp.eq.f32.partialorder %v1452, 8.507059e+37
    %v1454 = vand.u32 %v1441, 2147483648
    %v1455 = vor.u32 1.1754944e-38, %v1454
    %v1456 = vsel %vm1453, %v1455, %v1451
    %v1457 = vmul.f32 1.0, %v1456
    %v1458 = vrcp.pop %v1442
    %v1459 = vmul.f32 %v1442, %v1458
    %v1460 = vsub.f32 1.0, %v1459
    %v1461 = vmul.f32 %v1458, %v1460
    %v1462 = vadd.f32 %v1458, %v1461
    %vm1463 = vweird.f32 %v1442
    %vm1464 = vweird.f32 %v1458
    %vm1465 = vmor %vm1463, %vm1464
    %v1466 = vsel %vm1465, %v1458, %v1462
    %v1467 = vand.u32 2147483647, %v1442
    %vm1468 = vcmp.eq.f32.partialorder %v1467, 8.507059e+37
    %v1469 = vand.u32 %v1442, 2147483648
    %v1470 = vor.u32 1.1754944e-38, %v1469
    %v1471 = vsel %vm1468, %v1470, %v1466
    %v1472 = vmul.f32 1.0, %v1471
    %v1473 = vmul.f32 %v1433, %v1457
    %v1474 = vmul.f32 %v1434, %v1472
    %v1475 = vmul.f32 %v1473, %v185
    %v1476 = vmul.f32 %v1474, %v220
    %v1477 = vadd.f32 %v1473, %v1474
    %1478 = vadd.xlane.f32.xlu0 %v1477
    %v1479 = vpop.xlane.xlu0 %1478
    %v1480 = vmul.f32 %v1479, 0.00390625
    %v1481 = vld [vmem:[%s9] sm:$0xff]
    %v1482 = vld [vmem:[%s10] sm:$0xff]
    %v1484 = vsel %vm136, %v1481, 0
    %1486 = vmatpush.msra.mxu0 0.0
    %1487 = vmatpush.msra.mxu0 0.0
    %1488 = vmatpush.msra.mxu0 0.0
    %1489 = vmatpush.msra.mxu0 0.0
    %1490 = vmatpush.msra.mxu0 0.0
    %1491 = vmatpush.msra.mxu0 0.0
    %1492 = vmatpush.msra.mxu0 0.0
    %1493 = vmatpush.msra.mxu0 0.0
    %1494 = vmatpush.msra.mxu0 0.0
    %1495 = vmatpush.msra.mxu0 0.0
    %1496 = vmatpush.msra.mxu0 0.0
    %1497 = vmatpush.msra.mxu0 0.0
    %1498 = vmatpush.msra.mxu0 0.0
    %1499 = vmatpush.msra.mxu0 0.0
    %1500 = vmatpush.msra.mxu0 0.0
    %1501 = vmatpush.msra.mxu0 %v1480
    %1502 = vmatmul.f32.gmra.mxu0 %v1484
    %v1503 = vpop.f32.mrf.mxu0
    %v1504 = vadd.f32 %v1482, %v1503
    %1505 = vdwg.mxu0
    %v1506 = vsub.f32 0.0, %v1504
    %v1507 = vmul.f32 %v1506, 1.442695
    %v1508 = vpow.pop %v1507
    %v1509 = vadd.f32 %v1508, 1.0
    %v1510 = vrcp.pop %v1509
    %v1511 = vmul.f32 %v1509, %v1510
    %v1512 = vsub.f32 1.0, %v1511
    %v1513 = vmul.f32 %v1510, %v1512
    %v1514 = vadd.f32 %v1510, %v1513
    %vm1515 = vweird.f32 %v1509
    %vm1516 = vweird.f32 %v1510
    %vm1517 = vmor %vm1515, %vm1516
    %v1518 = vsel %vm1517, %v1510, %v1514
    %v1519 = vand.u32 2147483647, %v1509
    %vm1520 = vcmp.eq.f32.partialorder %v1519, 8.507059e+37
    %v1521 = vand.u32 %v1509, 2147483648
    %v1522 = vor.u32 1.1754944e-38, %v1521
    %v1523 = vsel %vm1520, %v1522, %v1518
    %v1524 = vmul.f32 1.0, %v1523
    %v1525 = vmul.f32 %v1504, %v1524
    %1527 = vset.pattern.permute.xlu0 0
    %1528 = vperm.xlu0 %1527, %v1525
    %v1529 = vpop.permute.xlu0 %1528
    %v1531 = vmul.f32 %v1529, %v188
    %v1532 = vmul.f32 %v1529, %v223
    %v1533 = vadd.f32 %v391, %v773
    %v1534 = vadd.f32 %v392, %v774
    %v1535 = vadd.f32 %v1475, %v1531
    %v1536 = vadd.f32 %v1476, %v1532
    %v1537 = vadd.f32 %v1533, %v1535
    %v1538 = vadd.f32 %v1534, %v1536
    %v1539 = vld [vmem:[%s11] sm:$0xff]
    %v1540 = vld [vmem:[%s11 + $0x8] sm:$0xff]
    %v1541 = vmul.f32 %v173, %v1537
    %v1542 = vmul.f32 %v208, %v1538
    %v1543 = vld [vmem:[%s12] sm:$0xff]
    %v1544 = vld [vmem:[%s12 + $0x8] sm:$0xff]
    %1546 = vset.pattern.permute.xlu0 0
    %1547 = vperm.xlu0 %1546, %v1543
    %v1548 = vpop.permute.xlu0 %1547
    %1551 = vset.pattern.permute.xlu0 0
    %1552 = vperm.xlu0 %1551, %v1544
    %v1553 = vpop.permute.xlu0 %1552
    %v1556 = vsel %vm136, %v1539, 0
    %v1559 = vsel %vm136, %v1540, 0
    %1561 = vmatpush.msra.mxu0 0.0
    %1562 = vmatpush.msra.mxu0 0.0
    %1563 = vmatpush.msra.mxu0 0.0
    %1564 = vmatpush.msra.mxu0 0.0
    %1565 = vmatpush.msra.mxu0 0.0
    %1566 = vmatpush.msra.mxu0 0.0
    %1567 = vmatpush.msra.mxu0 0.0
    %1568 = vmatpush.msra.mxu0 0.0
    %1569 = vmatpush.msra.mxu0 0.0
    %1570 = vmatpush.msra.mxu0 0.0
    %1571 = vmatpush.msra.mxu0 0.0
    %1572 = vmatpush.msra.mxu0 0.0
    %1573 = vmatpush.msra.mxu0 0.0
    %1574 = vmatpush.msra.mxu0 0.0
    %1575 = vmatpush.msra.mxu0 0.0
    %1576 = vmatpush.msra.mxu0 %v1541
    %1577 = vmatmul.f32.gmra.mxu0 %v1556
    %v1578 = vpop.f32.mrf.mxu0
    %v1579 = vadd.f32 %v1548, %v1578
    %1580 = vmatmul.f32.gmra.mxu0 %v1559
    %v1581 = vpop.f32.mrf.mxu0
    %v1582 = vadd.f32 %v1553, %v1581
    %1583 = vdwg.mxu0
    %1584 = vmatpush.msra.mxu0 0.0
    %1585 = vmatpush.msra.mxu0 0.0
    %1586 = vmatpush.msra.mxu0 0.0
    %1587 = vmatpush.msra.mxu0 0.0
    %1588 = vmatpush.msra.mxu0 0.0
    %1589 = vmatpush.msra.mxu0 0.0
    %1590 = vmatpush.msra.mxu0 0.0
    %1591 = vmatpush.msra.mxu0 0.0
    %1592 = vmatpush.msra.mxu0 0.0
    %1593 = vmatpush.msra.mxu0 0.0
    %1594 = vmatpush.msra.mxu0 0.0
    %1595 = vmatpush.msra.mxu0 0.0
    %1596 = vmatpush.msra.mxu0 0.0
    %1597 = vmatpush.msra.mxu0 0.0
    %1598 = vmatpush.msra.mxu0 0.0
    %1599 = vmatpush.msra.mxu0 %v1542
    %1600 = vmatmul.f32.gmra.mxu0 %v1556
    %v1601 = vpop.f32.mrf.mxu0
    %v1602 = vadd.f32 %v1548, %v1601
    %1603 = vmatmul.f32.gmra.mxu0 %v1559
    %v1604 = vpop.f32.mrf.mxu0
    %v1605 = vadd.f32 %v1553, %v1604
    %1606 = vdwg.mxu0
    %1607 = vst [vmem:[#allocation8] sm:$0xff] %v1579
    %1608 = vst [vmem:[#allocation8 + $0x8] sm:$0xff] %v1602
    %1609 = vst [vmem:[#allocation8 + $0x10] sm:$0xff] %v1582
    %1610 = vst [vmem:[#allocation8 + $0x18] sm:$0xff] %v1605
    // Predicated region
    $region66: #{tpu_custom_call.1} parent=1 // pred_check
      _
    $region67: #{tpu_custom_call.1} parent=1 // pred_check_branch
      %1612 = sbr.rel (0) target = $region69
    $region68: #{tpu_custom_call.1} parent=1 // pred_region
      %1614 = vsyncadd [#allocation4], 0
      %s1615 = sshll.u32 [#allocation8], 4
      %s1616 = int_to_ptr.vmem [resolvable:$true] %s1615
      %s1617 = sshll.u32 %s13, 4
      %s1618 = int_to_ptr.hbm [resolvable:$true] %s1617
      %1623 = dma.vmem_to_hbm [thread:$0]  %s1616, 512, %s1618, [#allocation4], 256, 256, 16
    $region69: #{tpu_custom_call.1} parent=1 // pred_fallthru
      _
    // Predicated region
    $region70: #{tpu_custom_call.1} parent=1 // pred_check
      _
    $region71: #{tpu_custom_call.1} parent=1 // pred_check_branch
      %1625 = sbr.rel (0) target = $region73
    $region72: #{tpu_custom_call.1} parent=1 // pred_region
      %1627 = dma.done [#allocation4], 512
    $region73: #{tpu_custom_call.1} parent=1 // pred_fallthru
      _
    %1628 = vsyncpa [#allocation3], 1
    %1629 = vsyncpa [#allocation6], 1
    %1630 = vsyncpa [#allocation4], 1

</llo_original>
